<compile_context>
chip_gen: v7x
topology: tpu7x:2x2x1
jax: 0.10.0
libtpu: 0.0.40
codegen_flags: <defaults>
</compile_context>

<pallas_src>
import functools

import jax
import jax.numpy as jnp
from jax.experimental import pallas as pl
from jax.experimental.pallas import tpu as pltpu

# ---------------- model hyperparameters (small, consistent with the module) ----------------
EMBEDDER_DEPTH = 3
IN_CHANNELS = 8
HIDDEN_CHANNELS = 32
LIN1_OUT = 8
OUT_CHANNELS = 1

N_NODES = 16          # nodes per graph-batch (2 graphs x 8 nodes)
N_GRAPHS = 2          # graphs per graph-batch
BATCH = 8             # graph-batches fused into one (flattened) super-batch -> 128 node rows
BN_EPS = 1e-5

HEAD_PAD = 128        # lane-dense padding width for the MLP head / output


def _round_up(x, m):
    return ((x + m - 1) // m) * m


def _head_layout(hidden):
    """Row offsets inside the packed MLP-head array (all segments 8-row aligned)."""
    b1_row = hidden                                   # Linear1 bias row
    w2_start = _round_up(hidden + 1, 8)               # Linear2 weight rows (padded to 128x128)
    b2_row = w2_start + HEAD_PAD                      # Linear2 bias row
    total_rows = _round_up(b2_row + 1, 8)
    return b1_row, w2_start, b2_row, total_rows


def _default_grid_steps(batch):
    """1 step on single-TC chips (v5e/v6e); 2 steps on v7x so both TensorCores work."""
    try:
        kind = jax.devices()[0].device_kind.lower()
        if "v7" in kind and batch % 2 == 0:
            return 2
    except Exception:
        pass
    return 1


# ---------------------------------- kernel ----------------------------------
def _chem_gcn_kernel(x_ref, a_ref, convw_ref, aff_ref, head_ref, out_ref, *,
                     depth, c_in, hidden, nodes_per_graph, fold_bn):
    a_hat = a_ref[...]                                # [GN, GN] block-diagonal, f32
    x = x_ref[...]                                    # [GN, C_in] f32

    # ---- encoder: ChemConvBlock x depth (whole flattened super-batch at once) ----
    for l in range(depth):
        aff = aff_ref[l]                              # [8, H]
        bias = aff[0:1, :]

        if l == 0:
            # C_in < H: (A_hat @ x) @ W0 is cheaper than A_hat @ (x @ W0)
            ax = jnp.dot(a_hat, x, preferred_element_type=jnp.float32)          # [GN, C_in]
            z = jnp.dot(ax, convw_ref[0][:c_in, :],
                        preferred_element_type=jnp.float32)                     # [GN, H]
        else:
            xw = jnp.dot(x, convw_ref[l], preferred_element_type=jnp.float32)   # [GN, H]
            z = jnp.dot(a_hat, xw, preferred_element_type=jnp.float32)          # [GN, H]

        if fold_bn:
            # BN scale folded into W / bias at pack time (valid: scale > 0, checked);
            # only the BN shift remains after the ReLU.
            x = jnp.maximum(z + bias, 0.0) + aff[1:2, :]
        else:
            x = jnp.maximum(z + bias, 0.0)            # GCNConv bias + ReLU
            x = x * aff[1:2, :] + aff[2:3, :]         # BatchNorm1d (eval / running stats)
        # dropout: eval-mode identity

    # ---- global_max_pool: per-graph nodes are contiguous, equal-size blocks ----
    n_pool = x.shape[0] // nodes_per_graph
    pooled = jnp.max(x.reshape(n_pool, nodes_per_graph, hidden), axis=1)        # [groupB*G, H]

    # ---- MLP head (once per step): Linear(H, 8) -> ReLU -> Linear(8, OUT), lane-padded ----
    b1_row, w2_start, b2_row, _ = _head_layout(hidden)
    w1 = head_ref[0:hidden, :]                        # [H, 128]   (cols >= 8 are zero)
    b1 = head_ref[b1_row:b1_row + 1, :]               # [1, 128]
    w2 = head_ref[w2_start:w2_start + HEAD_PAD, :]    # [128, 128] (only [0:8, 0:OUT] nonzero)
    b2 = head_ref[b2_row:b2_row + 1, :]               # [1, 128]

    y = jnp.maximum(jnp.dot(pooled, w1, preferred_element_type=jnp.float32) + b1, 0.0)
    y = jnp.dot(y, w2, preferred_element_type=jnp.float32) + b2                 # [groupB*G, 128]
    out_ref[...] = y.astype(out_ref.dtype)            # sublane/lane-dense, unmasked store


# ---------------------------- parameter packing -----------------------------
def pack_params(params, depth, c_in, hidden, out_channels, fold_bn):
    """Collapse the per-layer / head parameters into 3 stacked arrays."""
    convw = jnp.zeros((depth, hidden, hidden), jnp.float32)
    aff = jnp.zeros((depth, 8, hidden), jnp.float32)
    for l in range(depth):
        w = params["conv_w"][l]
        b = params["conv_b"][l].reshape(-1)
        s = params["bn_scale"][l].reshape(-1)
        t = params["bn_shift"][l].reshape(-1)
        if fold_bn:
            # ReLU(z)*s == ReLU(z*s) for s > 0  ->  fold s into W and bias, keep shift only.
            w = w * s[None, :]
            b = b * s
            aff = aff.at[l, 0, :].set(b)
            aff = aff.at[l, 1, :].set(t)
        else:
            aff = aff.at[l, 0, :].set(b)
            aff = aff.at[l, 1, :].set(s)
            aff = aff.at[l, 2, :].set(t)
        if l == 0:
            convw = convw.at[0, :c_in, :].set(w)      # layer 0 occupies the first c_in rows
        else:
            convw = convw.at[l].set(w)

    # MLP head packed into one lane-dense [rows, 128] slab (zero padding keeps math exact).
    b1_row, w2_start, b2_row, total_rows = _head_layout(hidden)
    head = jnp.zeros((total_rows, HEAD_PAD), jnp.float32)
    head = head.at[:hidden, :params["lin1_w"].shape[1]].set(params["lin1_w"])
    head = head.at[b1_row, :params["lin1_b"].shape[-1]].set(params["lin1_b"].reshape(-1))
    head = head.at[w2_start:w2_start + params["lin2_w"].shape[0], :out_channels].set(
        params["lin2_w"])
    head = head.at[b2_row, :out_channels].set(params["lin2_b"].reshape(-1))
    return convw, aff, head


# -------------------------------- wrapper ------------------------------------
def chem_gcn_reg_forward(x, a_hat, params, *, depth, n_graphs, grid_steps=None):
    """x: [B, N, C_in], a_hat: [B, N, N]. Returns [B, G, OUT]."""
    batch, n_nodes, c_in = x.shape
    hidden = params["conv_w"][0].shape[1]
    out_channels = params["lin2_w"].shape[1]

    if grid_steps is None:
        grid_steps = _default_grid_steps(batch)
    assert batch % grid_steps == 0, "batch must divide evenly into grid steps"
    group_b = batch // grid_steps
    gn = group_b * n_nodes                 # flattened node rows per grid step
    group_rows = group_b * n_graphs        # pooled rows per grid step

    # Fold BN scale into conv weights only when it is concretely known to be positive.
    try:
        fold_bn = bool(all(bool(jnp.all(params["bn_scale"][l] > 0)) for l in range(depth)))
    except Exception:
        fold_bn = False

    convw, aff, head = pack_params(params, depth, c_in, hidden, out_channels, fold_bn)
    head_rows = head.shape[0]

    # ---- layout plumbing, done once outside the kernel ----
    x_flat = x.reshape(grid_steps, gn, c_in)
    a_big = jnp.zeros((grid_steps, gn, gn), jnp.float32)
    for g in range(grid_steps):
        for j in range(group_b):
            b = g * group_b + j
            r = j * n_nodes
            a_big = a_big.at[g, r:r + n_nodes, r:r + n_nodes].set(a_hat[b])

    kernel = functools.partial(_chem_gcn_kernel, depth=depth, c_in=c_in, hidden=hidden,
                               nodes_per_graph=n_nodes // n_graphs, fold_bn=fold_bn)

    out = pl.pallas_call(
        kernel,
        out_shape=jax.ShapeDtypeStruct((grid_steps, group_rows, HEAD_PAD), jnp.float32),
        grid=(grid_steps,),
        in_specs=[
            pl.BlockSpec((None, gn, c_in), lambda s: (s, 0, 0)),             # x (flattened)
            pl.BlockSpec((None, gn, gn), lambda s: (s, 0, 0)),               # block-diag A_hat
            pl.BlockSpec((depth, hidden, hidden), lambda s: (0, 0, 0)),      # packed conv weights
            pl.BlockSpec((depth, 8, hidden), lambda s: (0, 0, 0)),           # packed affine params
            pl.BlockSpec((head_rows, HEAD_PAD), lambda s: (0, 0)),           # packed MLP head
        ],
        out_specs=pl.BlockSpec((None, group_rows, HEAD_PAD), lambda s: (s, 0, 0)),
        compiler_params=pltpu.CompilerParams(dimension_semantics=("parallel",)),
    )(x_flat, a_big, convw, aff, head)

    return out.reshape(batch, n_graphs, HEAD_PAD)[:, :, :out_channels]


# ------------------- deterministic parameter / input builders -------------------
def make_params(key, depth, c_in, hidden, c_out):
    params = {"conv_w": [], "conv_b": [], "bn_scale": [], "bn_shift": []}
    for l in range(depth):
        fan_in = c_in if l == 0 else hidden
        key, k1 = jax.random.split(key)
        scale = (2.0 / (fan_in + hidden)) ** 0.5
        params["conv_w"].append(scale * jax.random.normal(k1, (fan_in, hidden), jnp.float32))
        params["conv_b"].append(jnp.zeros((1, hidden), jnp.float32))
        # BatchNorm eval with untrained stats: gamma=1, beta=0, mean=0, var=1
        params["bn_scale"].append(jnp.full((1, hidden), 1.0 / jnp.sqrt(1.0 + BN_EPS), jnp.float32))
        params["bn_shift"].append(jnp.zeros((1, hidden), jnp.float32))

    key, k1, k2, k3, k4 = jax.random.split(key, 5)
    b1 = 1.0 / (hidden ** 0.5)
    params["lin1_w"] = jax.random.uniform(k1, (hidden, LIN1_OUT), jnp.float32, -b1, b1)
    params["lin1_b"] = jax.random.uniform(k2, (1, LIN1_OUT), jnp.float32, -b1, b1)
    b2 = 1.0 / (LIN1_OUT ** 0.5)
    params["lin2_w"] = jax.random.uniform(k3, (LIN1_OUT, c_out), jnp.float32, -b2, b2)
    params["lin2_b"] = jax.random.uniform(k4, (1, c_out), jnp.float32, -b2, b2)
    return params


def make_graph_inputs(key, batch, n_nodes, n_graphs, c_in):
    key, kx = jax.random.split(key)
    x = jax.random.normal(kx, (batch, n_nodes, c_in), jnp.float32)

    # deterministic edge set: undirected ring inside each graph; nodes per graph contiguous
    nodes_per_graph = n_nodes // n_graphs
    adj = jnp.zeros((n_nodes, n_nodes), jnp.float32)
    for g in range(n_graphs):
        base = g * nodes_per_graph
        for i in range(nodes_per_graph):
            u = base + i
            v = base + (i + 1) % nodes_per_graph
            adj = adj.at[u, v].set(1.0)
            adj = adj.at[v, u].set(1.0)
    adj = adj + jnp.eye(n_nodes, dtype=jnp.float32)            # self loops
    deg = jnp.sum(adj, axis=1)
    d_inv_sqrt = 1.0 / jnp.sqrt(deg)
    a_hat = d_inv_sqrt[:, None] * adj * d_inv_sqrt[None, :]
    a_hat = jnp.tile(a_hat[None], (batch, 1, 1))               # same topology per graph-batch
    return x, a_hat


# ------------------------------ pure-JAX reference ------------------------------
def reference_forward(x, a_hat, params, *, depth, n_graphs):
    outs = []
    for i in range(x.shape[0]):
        h = x[i]
        a = a_hat[i]
        for l in range(depth):
            h = jnp.dot(a, jnp.dot(h, params["conv_w"][l])) + params["conv_b"][l]
            h = jnp.maximum(h, 0.0)
            h = h * params["bn_scale"][l] + params["bn_shift"][l]
        npg = h.shape[0] // n_graphs
        pooled = jnp.max(h.reshape(n_graphs, npg, -1), axis=1)
        y = jnp.maximum(jnp.dot(pooled, params["lin1_w"]) + params["lin1_b"], 0.0)
        y = jnp.dot(y, params["lin2_w"]) + params["lin2_b"]
        outs.append(y)
    return jnp.stack(outs, axis=0)


if __name__ == "__main__":
    key = jax.random.PRNGKey(0)
    k_params, k_data = jax.random.split(key)

    params = make_params(k_params, EMBEDDER_DEPTH, IN_CHANNELS, HIDDEN_CHANNELS, OUT_CHANNELS)
    x, a_hat = make_graph_inputs(k_data, BATCH, N_NODES, N_GRAPHS, IN_CHANNELS)

    out = chem_gcn_reg_forward(x, a_hat, params, depth=EMBEDDER_DEPTH, n_graphs=N_GRAPHS)
    out = jax.block_until_ready(out)
    assert out.shape == (BATCH, N_GRAPHS, OUT_CHANNELS)

    ref = reference_forward(x, a_hat, params, depth=EMBEDDER_DEPTH, n_graphs=N_GRAPHS)
    assert jnp.allclose(out, ref, rtol=1e-4, atol=1e-4), (out, ref)
    print("KERNEL_OK")
</pallas_src>

<mosaic_0001>
module attributes {stable_mosaic.version = 11 : i64} {
  func.func @_chem_gcn_kernel(%arg0: i32, %arg1: memref<1x128x8xf32, #tpu.memory_space<vmem>>, %arg2: memref<1x128x128xf32, #tpu.memory_space<vmem>>, %arg3: memref<3x32x32xf32, #tpu.memory_space<vmem>>, %arg4: memref<3x8x32xf32, #tpu.memory_space<vmem>>, %arg5: memref<176x128xf32, #tpu.memory_space<vmem>>, %arg6: memref<1x16x128xf32, #tpu.memory_space<vmem>>) attributes {dimension_semantics = [#tpu.dimension_semantics<parallel>], iteration_bounds = array<i64: 1>, scalar_prefetch = 0 : i64, scratch_operands = 0 : i64, tpu.core_type = #tpu.core_type<tc>, window_params = [{transform_indices = @transform_0, window_bounds = array<i64: 1, 128, 8>}, {transform_indices = @transform_1, window_bounds = array<i64: 1, 128, 128>}, {pipeline_mode = #tpu.pipeline_mode<synchronous>, transform_indices = @transform_2, window_bounds = array<i64: 3, 32, 32>}, {pipeline_mode = #tpu.pipeline_mode<synchronous>, transform_indices = @transform_3, window_bounds = array<i64: 3, 8, 32>}, {pipeline_mode = #tpu.pipeline_mode<synchronous>, transform_indices = @transform_4, window_bounds = array<i64: 176, 128>}, {transform_indices = @transform_5, window_bounds = array<i64: 1, 16, 128>}]} {
    %c0 = arith.constant 0 : index
    %c0_0 = arith.constant 0 : index
    %c0_1 = arith.constant 0 : index
    %0 = vector.load %arg2[%c0, %c0_0, %c0_1] : memref<1x128x128xf32, #tpu.memory_space<vmem>>, vector<1x128x128xf32>
    %1 = vector.shape_cast %0 : vector<1x128x128xf32> to vector<128x128xf32>
    %c0_2 = arith.constant 0 : index
    %c0_3 = arith.constant 0 : index
    %c0_4 = arith.constant 0 : index
    %2 = vector.load %arg1[%c0_2, %c0_3, %c0_4] : memref<1x128x8xf32, #tpu.memory_space<vmem>>, vector<1x128x8xf32>
    %3 = vector.shape_cast %2 : vector<1x128x8xf32> to vector<128x8xf32>
    %c0_5 = arith.constant 0 : index
    %c0_6 = arith.constant 0 : index
    %c0_7 = arith.constant 0 : index
    %4 = vector.load %arg4[%c0_5, %c0_6, %c0_7] : memref<3x8x32xf32, #tpu.memory_space<vmem>>, vector<1x8x32xf32>
    %5 = vector.shape_cast %4 : vector<1x8x32xf32> to vector<8x32xf32>
    %6 = vector.extract_strided_slice %5 {offsets = [0, 0], sizes = [1, 32], strides = [1, 1]} : vector<8x32xf32> to vector<1x32xf32>
    %cst = arith.constant dense<0.000000e+00> : vector<128x8xf32>
    %7 = tpu.matmul %1, %3, %cst {dimension_numbers = #tpu.dot_dimension_numbers<[1], [0], [0], [1], [0, 0, 1, 1], [], []>} : vector<128x128xf32>, vector<128x8xf32>, vector<128x8xf32> -> vector<128x8xf32>
    %c0_8 = arith.constant 0 : index
    %c0_9 = arith.constant 0 : index
    %c0_10 = arith.constant 0 : index
    %8 = vector.load %arg3[%c0_8, %c0_9, %c0_10] : memref<3x32x32xf32, #tpu.memory_space<vmem>>, vector<1x32x32xf32>
    %9 = vector.shape_cast %8 : vector<1x32x32xf32> to vector<32x32xf32>
    %10 = vector.extract_strided_slice %9 {offsets = [0, 0], sizes = [8, 32], strides = [1, 1]} : vector<32x32xf32> to vector<8x32xf32>
    %cst_11 = arith.constant dense<0.000000e+00> : vector<128x32xf32>
    %11 = tpu.matmul %7, %10, %cst_11 {dimension_numbers = #tpu.dot_dimension_numbers<[1], [0], [0], [1], [0, 0, 1, 1], [], []>} : vector<128x8xf32>, vector<8x32xf32>, vector<128x32xf32> -> vector<128x32xf32>
    %12 = vector.broadcast %6 : vector<1x32xf32> to vector<128x32xf32>
    %13 = arith.addf %11, %12 : vector<128x32xf32>
    %cst_12 = arith.constant 0.000000e+00 : f32
    %14 = vector.broadcast %cst_12 : f32 to vector<128x32xf32>
    %15 = arith.maximumf %13, %14 : vector<128x32xf32>
    %16 = vector.extract_strided_slice %5 {offsets = [1, 0], sizes = [1, 32], strides = [1, 1]} : vector<8x32xf32> to vector<1x32xf32>
    %17 = vector.broadcast %16 : vector<1x32xf32> to vector<128x32xf32>
    %18 = arith.addf %15, %17 : vector<128x32xf32>
    %c1 = arith.constant 1 : index
    %c0_13 = arith.constant 0 : index
    %c0_14 = arith.constant 0 : index
    %19 = vector.load %arg4[%c1, %c0_13, %c0_14] : memref<3x8x32xf32, #tpu.memory_space<vmem>>, vector<1x8x32xf32>
    %20 = vector.shape_cast %19 : vector<1x8x32xf32> to vector<8x32xf32>
    %21 = vector.extract_strided_slice %20 {offsets = [0, 0], sizes = [1, 32], strides = [1, 1]} : vector<8x32xf32> to vector<1x32xf32>
    %c1_15 = arith.constant 1 : index
    %c0_16 = arith.constant 0 : index
    %c0_17 = arith.constant 0 : index
    %22 = vector.load %arg3[%c1_15, %c0_16, %c0_17] : memref<3x32x32xf32, #tpu.memory_space<vmem>>, vector<1x32x32xf32>
    %23 = vector.shape_cast %22 : vector<1x32x32xf32> to vector<32x32xf32>
    %cst_18 = arith.constant dense<0.000000e+00> : vector<128x32xf32>
    %24 = tpu.matmul %18, %23, %cst_18 {dimension_numbers = #tpu.dot_dimension_numbers<[1], [0], [0], [1], [0, 0, 1, 1], [], []>} : vector<128x32xf32>, vector<32x32xf32>, vector<128x32xf32> -> vector<128x32xf32>
    %cst_19 = arith.constant dense<0.000000e+00> : vector<128x32xf32>
    %25 = tpu.matmul %1, %24, %cst_19 {dimension_numbers = #tpu.dot_dimension_numbers<[1], [0], [0], [1], [0, 0, 1, 1], [], []>} : vector<128x128xf32>, vector<128x32xf32>, vector<128x32xf32> -> vector<128x32xf32>
    %26 = vector.broadcast %21 : vector<1x32xf32> to vector<128x32xf32>
    %27 = arith.addf %25, %26 : vector<128x32xf32>
    %cst_20 = arith.constant 0.000000e+00 : f32
    %28 = vector.broadcast %cst_20 : f32 to vector<128x32xf32>
    %29 = arith.maximumf %27, %28 : vector<128x32xf32>
    %30 = vector.extract_strided_slice %20 {offsets = [1, 0], sizes = [1, 32], strides = [1, 1]} : vector<8x32xf32> to vector<1x32xf32>
    %31 = vector.broadcast %30 : vector<1x32xf32> to vector<128x32xf32>
    %32 = arith.addf %29, %31 : vector<128x32xf32>
    %c2 = arith.constant 2 : index
    %c0_21 = arith.constant 0 : index
    %c0_22 = arith.constant 0 : index
    %33 = vector.load %arg4[%c2, %c0_21, %c0_22] : memref<3x8x32xf32, #tpu.memory_space<vmem>>, vector<1x8x32xf32>
    %34 = vector.shape_cast %33 : vector<1x8x32xf32> to vector<8x32xf32>
    %35 = vector.extract_strided_slice %34 {offsets = [0, 0], sizes = [1, 32], strides = [1, 1]} : vector<8x32xf32> to vector<1x32xf32>
    %c2_23 = arith.constant 2 : index
    %c0_24 = arith.constant 0 : index
    %c0_25 = arith.constant 0 : index
    %36 = vector.load %arg3[%c2_23, %c0_24, %c0_25] : memref<3x32x32xf32, #tpu.memory_space<vmem>>, vector<1x32x32xf32>
    %37 = vector.shape_cast %36 : vector<1x32x32xf32> to vector<32x32xf32>
    %cst_26 = arith.constant dense<0.000000e+00> : vector<128x32xf32>
    %38 = tpu.matmul %32, %37, %cst_26 {dimension_numbers = #tpu.dot_dimension_numbers<[1], [0], [0], [1], [0, 0, 1, 1], [], []>} : vector<128x32xf32>, vector<32x32xf32>, vector<128x32xf32> -> vector<128x32xf32>
    %cst_27 = arith.constant dense<0.000000e+00> : vector<128x32xf32>
    %39 = tpu.matmul %1, %38, %cst_27 {dimension_numbers = #tpu.dot_dimension_numbers<[1], [0], [0], [1], [0, 0, 1, 1], [], []>} : vector<128x128xf32>, vector<128x32xf32>, vector<128x32xf32> -> vector<128x32xf32>
    %40 = vector.broadcast %35 : vector<1x32xf32> to vector<128x32xf32>
    %41 = arith.addf %39, %40 : vector<128x32xf32>
    %cst_28 = arith.constant 0.000000e+00 : f32
    %42 = vector.broadcast %cst_28 : f32 to vector<128x32xf32>
    %43 = arith.maximumf %41, %42 : vector<128x32xf32>
    %44 = vector.extract_strided_slice %34 {offsets = [1, 0], sizes = [1, 32], strides = [1, 1]} : vector<8x32xf32> to vector<1x32xf32>
    %45 = vector.broadcast %44 : vector<1x32xf32> to vector<128x32xf32>
    %46 = arith.addf %43, %45 : vector<128x32xf32>
    %47 = vector.shape_cast %46 : vector<128x32xf32> to vector<16x8x32xf32>
    %cst_29 = arith.constant dense<0xFF800000> : vector<16x32xf32>
    %48 = vector.multi_reduction <maximumf>, %47, %cst_29 [1] : vector<16x8x32xf32> to vector<16x32xf32>
    %c0_30 = arith.constant 0 : index
    %c0_31 = arith.constant 0 : index
    %49 = vector.load %arg5[%c0_30, %c0_31] : memref<176x128xf32, #tpu.memory_space<vmem>>, vector<32x128xf32>
    %c32 = arith.constant 32 : index
    %c0_32 = arith.constant 0 : index
    %50 = vector.load %arg5[%c32, %c0_32] : memref<176x128xf32, #tpu.memory_space<vmem>>, vector<1x128xf32>
    %c40 = arith.constant 40 : index
    %c0_33 = arith.constant 0 : index
    %51 = vector.load %arg5[%c40, %c0_33] : memref<176x128xf32, #tpu.memory_space<vmem>>, vector<128x128xf32>
    %c168 = arith.constant 168 : index
    %c0_34 = arith.constant 0 : index
    %52 = vector.load %arg5[%c168, %c0_34] : memref<176x128xf32, #tpu.memory_space<vmem>>, vector<1x128xf32>
    %cst_35 = arith.constant dense<0.000000e+00> : vector<16x128xf32>
    %53 = tpu.matmul %48, %49, %cst_35 {dimension_numbers = #tpu.dot_dimension_numbers<[1], [0], [0], [1], [0, 0, 1, 1], [], []>} : vector<16x32xf32>, vector<32x128xf32>, vector<16x128xf32> -> vector<16x128xf32>
    %54 = vector.broadcast %50 : vector<1x128xf32> to vector<16x128xf32>
    %55 = arith.addf %53, %54 : vector<16x128xf32>
    %cst_36 = arith.constant 0.000000e+00 : f32
    %56 = vector.broadcast %cst_36 : f32 to vector<16x128xf32>
    %57 = arith.maximumf %55, %56 : vector<16x128xf32>
    %cst_37 = arith.constant dense<0.000000e+00> : vector<16x128xf32>
    %58 = tpu.matmul %57, %51, %cst_37 {dimension_numbers = #tpu.dot_dimension_numbers<[1], [0], [0], [1], [0, 0, 1, 1], [], []>} : vector<16x128xf32>, vector<128x128xf32>, vector<16x128xf32> -> vector<16x128xf32>
    %59 = vector.broadcast %52 : vector<1x128xf32> to vector<16x128xf32>
    %60 = arith.addf %58, %59 : vector<16x128xf32>
    %c0_38 = arith.constant 0 : index
    %c0_39 = arith.constant 0 : index
    %c0_40 = arith.constant 0 : index
    %61 = vector.load %arg6[%c0_38, %c0_39, %c0_40] : memref<1x16x128xf32, #tpu.memory_space<vmem>>, vector<1x16x128xf32>
    %62 = vector.shape_cast %61 : vector<1x16x128xf32> to vector<16x128xf32>
    %63 = vector.shape_cast %60 : vector<16x128xf32> to vector<1x16x128xf32>
    tpu.vector_store %arg6[%c0_38, %c0_39, %c0_40], %63 {strides = array<i32>} : memref<1x16x128xf32, #tpu.memory_space<vmem>>, vector<1x16x128xf32>,
    return
  }
  func.func @transform_0(%arg0: i32) -> (i32, i32, i32) {
    %c0_i32 = arith.constant 0 : i32
    %c0_i32_0 = arith.constant 0 : i32
    %c0_i32_1 = arith.constant 0 : i32
    return %arg0, %c0_i32, %c0_i32_0 : i32, i32, i32
  }
  func.func @transform_1(%arg0: i32) -> (i32, i32, i32) {
    %c0_i32 = arith.constant 0 : i32
    %c0_i32_0 = arith.constant 0 : i32
    %c0_i32_1 = arith.constant 0 : i32
    return %arg0, %c0_i32, %c0_i32_0 : i32, i32, i32
  }
  func.func @transform_2(%arg0: i32) -> (i32, i32, i32) {
    %c0_i32 = arith.constant 0 : i32
    %c0_i32_0 = arith.constant 0 : i32
    %c0_i32_1 = arith.constant 0 : i32
    %c0_i32_2 = arith.constant 0 : i32
    return %c0_i32, %c0_i32_0, %c0_i32_1 : i32, i32, i32
  }
  func.func @transform_3(%arg0: i32) -> (i32, i32, i32) {
    %c0_i32 = arith.constant 0 : i32
    %c0_i32_0 = arith.constant 0 : i32
    %c0_i32_1 = arith.constant 0 : i32
    %c0_i32_2 = arith.constant 0 : i32
    return %c0_i32, %c0_i32_0, %c0_i32_1 : i32, i32, i32
  }
  func.func @transform_4(%arg0: i32) -> (i32, i32) {
    %c0_i32 = arith.constant 0 : i32
    %c0_i32_0 = arith.constant 0 : i32
    %c0_i32_1 = arith.constant 0 : i32
    return %c0_i32, %c0_i32_0 : i32, i32
  }
  func.func @transform_5(%arg0: i32) -> (i32, i32, i32) {
    %c0_i32 = arith.constant 0 : i32
    %c0_i32_0 = arith.constant 0 : i32
    %c0_i32_1 = arith.constant 0 : i32
    return %arg0, %c0_i32, %c0_i32_0 : i32, i32, i32
  }
}

</mosaic_0001>

<llo_original>
// kernel: tpu_custom_call.1
$region0: #{tpu_custom_call.1}
  #allocation0 [shape = 'u32[]', space=smem, size = 0x4, offset = 0x4, fixed_abs, tag = 'smem constant byte address 0x4 - core index']
  #allocation1 [shape = 'u32[144,128]{1,0:T(1,128)}', space=vmem, size = 0x12000, scoped, tag = 'internal scratch']
  %s0 = inlined_call_operand.vmem [shape: f32[1,128,8], index: 0, kind: input, shape index: {}]
  %s1 = inlined_call_operand.vmem [shape: f32[1,128,128], index: 1, kind: input, shape index: {}]
  %s2 = inlined_call_operand.hbm [shape: f32[3,32,32], index: 2, kind: input, shape index: {}]
  %s3 = inlined_call_operand.hbm [shape: f32[3,8,32], index: 3, kind: input, shape index: {}]
  %s4 = inlined_call_operand.hbm [shape: f32[176,128], index: 4, kind: input, shape index: {}]
  %s5 = inlined_call_operand.hbm [shape: f32[1,16,128], index: 5, kind: output, shape index: {}]
  %s6 = sld [smem:[#allocation0]]
  $region42: #{tpu_custom_call.1} parent=0
    _
  %s8 = ssub.s32 1, %s6
  %s9 = scalar_select 0, %s8, %s6
  $region1: #{tpu_custom_call.1} parent=0
    #allocation2 [shape = 'u8[49152]{0}', space=vmem, size = 0xc000, scoped, tag = 'input window, operand 2, single buffered']
    #allocation3 [shape = 's32[1]{0}', space=sflag, size = 0x4, scoped, tag = 'scoped memory for tpu_custom_call.1']
    #allocation4 [shape = 's32[1]{0}', space=sflag, size = 0x4, scoped, tag = 'scoped memory for tpu_custom_call.1']
    #allocation5 [shape = 'u8[12288]{0}', space=vmem, size = 0x3000, scoped, tag = 'input window, operand 3, single buffered']
    #allocation6 [shape = 's32[1]{0}', space=sflag, size = 0x4, scoped, tag = 'scoped memory for tpu_custom_call.1']
    #allocation7 [shape = 'u8[90112]{0}', space=vmem, size = 0x16000, scoped, tag = 'input window, operand 4, single buffered']
    #allocation8 [shape = 'u8[8192]{0}', space=vmem, size = 0x2000, scoped, tag = 'output window, operand 0, single buffered']
    %10 = vsyncpa [#allocation3], 0
    %11 = vsyncpa [#allocation6], 0
    %12 = vsyncpa [#allocation4], 0
    // Predicated region
    $region2: #{tpu_custom_call.1} parent=1 // pred_check
      _
    $region3: #{tpu_custom_call.1} parent=1 // pred_check_branch
      %14 = sbr.rel (0) target = $region5
    $region4: #{tpu_custom_call.1} parent=1 // pred_region
      _
    $region5: #{tpu_custom_call.1} parent=1 // pred_fallthru
      _
    // Predicated region
    $region6: #{tpu_custom_call.1} parent=1 // pred_check
      _
    $region7: #{tpu_custom_call.1} parent=1 // pred_check_branch
      %16 = sbr.rel (0) target = $region9
    $region8: #{tpu_custom_call.1} parent=1 // pred_region
      _
    $region9: #{tpu_custom_call.1} parent=1 // pred_fallthru
      _
    // Predicated region
    $region10: #{tpu_custom_call.1} parent=1 // pred_check
      _
    $region11: #{tpu_custom_call.1} parent=1 // pred_check_branch
      %18 = sbr.rel (0) target = $region13
    $region12: #{tpu_custom_call.1} parent=1 // pred_region
      %s20 = ssub.s32 1536, 1536
      %21 = vsyncadd [#allocation3], %s20
      %s22 = sshll.u32 [#allocation2], 4
      %s23 = int_to_ptr.vmem [resolvable:$true] %s22
      %28 = dma.hbm_to_vmem [thread:$0]  %s2, 1536, %s23, [#allocation3], 128, 128, 8
    $region13: #{tpu_custom_call.1} parent=1 // pred_fallthru
      _
    // Predicated region
    $region14: #{tpu_custom_call.1} parent=1 // pred_check
      _
    $region15: #{tpu_custom_call.1} parent=1 // pred_check_branch
      %30 = sbr.rel (0) target = $region17
    $region16: #{tpu_custom_call.1} parent=1 // pred_region
      %s32 = ssub.s32 384, 384
      %33 = vsyncadd [#allocation6], %s32
      %s34 = sshll.u32 [#allocation5], 4
      %s35 = int_to_ptr.vmem [resolvable:$true] %s34
      %40 = dma.hbm_to_vmem [thread:$0]  %s3, 384, %s35, [#allocation6], 128, 128, 8
    $region17: #{tpu_custom_call.1} parent=1 // pred_fallthru
      _
    // Predicated region
    $region18: #{tpu_custom_call.1} parent=1 // pred_check
      _
    $region19: #{tpu_custom_call.1} parent=1 // pred_check_branch
      %42 = sbr.rel (0) target = $region21
    $region20: #{tpu_custom_call.1} parent=1 // pred_region
      %s44 = ssub.s32 2816, 2816
      %45 = vsyncadd [#allocation6], %s44
      %s46 = sshll.u32 [#allocation7], 4
      %s47 = int_to_ptr.vmem [resolvable:$true] %s46
      %52 = dma.hbm_to_vmem [thread:$0]  %s4, 2816, %s47, [#allocation6], 128, 128, 8
    $region21: #{tpu_custom_call.1} parent=1 // pred_fallthru
      _
    // Predicated region
    $region22: #{tpu_custom_call.1} parent=1 // pred_check
      _
    $region23: #{tpu_custom_call.1} parent=1 // pred_check_branch
      %54 = sbr.rel (0) target = $region25
    $region24: #{tpu_custom_call.1} parent=1 // pred_region
      %55 = dma.done [#allocation3], 1536
    $region25: #{tpu_custom_call.1} parent=1 // pred_fallthru
      _
    // Predicated region
    $region26: #{tpu_custom_call.1} parent=1 // pred_check
      _
    $region27: #{tpu_custom_call.1} parent=1 // pred_check_branch
      %57 = sbr.rel (0) target = $region29
    $region28: #{tpu_custom_call.1} parent=1 // pred_region
      %58 = dma.done [#allocation6], 384
    $region29: #{tpu_custom_call.1} parent=1 // pred_fallthru
      _
    // Predicated region
    $region30: #{tpu_custom_call.1} parent=1 // pred_check
      _
    $region31: #{tpu_custom_call.1} parent=1 // pred_check_branch
      %60 = sbr.rel (0) target = $region33
    $region32: #{tpu_custom_call.1} parent=1 // pred_region
      %61 = dma.done [#allocation6], 2816
    $region33: #{tpu_custom_call.1} parent=1 // pred_fallthru
      _
    %v62 = vld [vmem:[%s1] sm:$0xff]
    %v63 = vld [vmem:[%s1 + $0x8] sm:$0xff]
    %v64 = vld [vmem:[%s1 + $0x10] sm:$0xff]
    %v65 = vld [vmem:[%s1 + $0x18] sm:$0xff]
    %v66 = vld [vmem:[%s1 + $0x20] sm:$0xff]
    %v67 = vld [vmem:[%s1 + $0x28] sm:$0xff]
    %v68 = vld [vmem:[%s1 + $0x30] sm:$0xff]
    %v69 = vld [vmem:[%s1 + $0x38] sm:$0xff]
    %v70 = vld [vmem:[%s1 + $0x40] sm:$0xff]
    %v71 = vld [vmem:[%s1 + $0x48] sm:$0xff]
    %v72 = vld [vmem:[%s1 + $0x50] sm:$0xff]
    %v73 = vld [vmem:[%s1 + $0x58] sm:$0xff]
    %v74 = vld [vmem:[%s1 + $0x60] sm:$0xff]
    %v75 = vld [vmem:[%s1 + $0x68] sm:$0xff]
    %v76 = vld [vmem:[%s1 + $0x70] sm:$0xff]
    %v77 = vld [vmem:[%s1 + $0x78] sm:$0xff]
    %v78 = vld [vmem:[%s0] sm:$0xff]
    %v79 = vld [vmem:[%s0 + $0x8] sm:$0xff]
    %v80 = vld [vmem:[%s0 + $0x10] sm:$0xff]
    %v81 = vld [vmem:[%s0 + $0x18] sm:$0xff]
    %v82 = vld [vmem:[%s0 + $0x20] sm:$0xff]
    %v83 = vld [vmem:[%s0 + $0x28] sm:$0xff]
    %v84 = vld [vmem:[%s0 + $0x30] sm:$0xff]
    %v85 = vld [vmem:[%s0 + $0x38] sm:$0xff]
    %v86 = vld [vmem:[%s0 + $0x40] sm:$0xff]
    %v87 = vld [vmem:[%s0 + $0x48] sm:$0xff]
    %v88 = vld [vmem:[%s0 + $0x50] sm:$0xff]
    %v89 = vld [vmem:[%s0 + $0x58] sm:$0xff]
    %v90 = vld [vmem:[%s0 + $0x60] sm:$0xff]
    %v91 = vld [vmem:[%s0 + $0x68] sm:$0xff]
    %v92 = vld [vmem:[%s0 + $0x70] sm:$0xff]
    %v93 = vld [vmem:[%s0 + $0x78] sm:$0xff]
    %v94 = vld [vmem:[#allocation5] sm:$0xff]
    %95 = vmatprep.subr.mxu0 0.0
    %96 = vmatpush1.msra.mxu0 %v78
    %97 = vmatprep.subr.mxu0 0.0
    %98 = vmatpush1.msra.mxu0 %v79
    %99 = vmatprep.subr.mxu0 0.0
    %100 = vmatpush1.msra.mxu0 %v80
    %101 = vmatprep.subr.mxu0 0.0
    %102 = vmatpush1.msra.mxu0 %v81
    %103 = vmatprep.subr.mxu0 0.0
    %104 = vmatpush1.msra.mxu0 %v82
    %105 = vmatprep.subr.mxu0 0.0
    %106 = vmatpush1.msra.mxu0 %v83
    %107 = vmatprep.subr.mxu0 0.0
    %108 = vmatpush1.msra.mxu0 %v84
    %109 = vmatprep.subr.mxu0 0.0
    %110 = vmatpush1.msra.mxu0 %v85
    %111 = vmatprep.subr.mxu0 0.0
    %112 = vmatpush1.msra.mxu0 %v86
    %113 = vmatprep.subr.mxu0 0.0
    %114 = vmatpush1.msra.mxu0 %v87
    %115 = vmatprep.subr.mxu0 0.0
    %116 = vmatpush1.msra.mxu0 %v88
    %117 = vmatprep.subr.mxu0 0.0
    %118 = vmatpush1.msra.mxu0 %v89
    %119 = vmatprep.subr.mxu0 0.0
    %120 = vmatpush1.msra.mxu0 %v90
    %121 = vmatprep.subr.mxu0 0.0
    %122 = vmatpush1.msra.mxu0 %v91
    %123 = vmatprep.subr.mxu0 0.0
    %124 = vmatpush1.msra.mxu0 %v92
    %125 = vmatprep.subr.mxu0 0.0
    %126 = vmatpush1.msra.mxu0 %v93
    %127 = vmatprep.subr.mxu0 0.0
    %128 = vmatpush1.msra.mxu0 0.0
    %129 = vmatprep.subr.mxu0 0.0
    %130 = vmatpush1.msra.mxu0 0.0
    %131 = vmatprep.subr.mxu0 0.0
    %132 = vmatpush1.msra.mxu0 0.0
    %133 = vmatprep.subr.mxu0 0.0
    %134 = vmatpush1.msra.mxu0 0.0
    %135 = vmatprep.subr.mxu0 0.0
    %136 = vmatpush1.msra.mxu0 0.0
    %137 = vmatprep.subr.mxu0 0.0
    %138 = vmatpush1.msra.mxu0 0.0
    %139 = vmatprep.subr.mxu0 0.0
    %140 = vmatpush1.msra.mxu0 0.0
    %141 = vmatprep.subr.mxu0 0.0
    %142 = vmatpush1.msra.mxu0 0.0
    %143 = vmatprep.subr.mxu0 0.0
    %144 = vmatpush1.msra.mxu0 0.0
    %145 = vmatprep.subr.mxu0 0.0
    %146 = vmatpush1.msra.mxu0 0.0
    %147 = vmatprep.subr.mxu0 0.0
    %148 = vmatpush1.msra.mxu0 0.0
    %149 = vmatprep.subr.mxu0 0.0
    %150 = vmatpush1.msra.mxu0 0.0
    %151 = vmatprep.subr.mxu0 0.0
    %152 = vmatpush1.msra.mxu0 0.0
    %153 = vmatprep.subr.mxu0 0.0
    %154 = vmatpush1.msra.mxu0 0.0
    %155 = vmatprep.subr.mxu0 0.0
    %156 = vmatpush1.msra.mxu0 0.0
    %157 = vmatprep.subr.mxu0 0.0
    %158 = vmatpush1.msra.mxu0 0.0
    %159 = vmatprep.mubr.f32.mxu0 0.0
    %160 = vmatmul.mubr.f32.gmra.mrb[0].mxu0 %v62
    %v161 = vpop.f32.mrb[0].mxu0
    %v162 = vadd.f32 0.0, %v161
    %v163 = vpop.f32.mrb[0].mxu0
    %164 = vmatprep.mubr.f32.mxu0 0.0
    %165 = vmatmul.mubr.f32.gmra.mrb[0].mxu0 %v63
    %v166 = vpop.f32.mrb[0].mxu0
    %v167 = vadd.f32 0.0, %v166
    %v168 = vpop.f32.mrb[0].mxu0
    %169 = vmatprep.mubr.f32.mxu0 0.0
    %170 = vmatmul.mubr.f32.gmra.mrb[0].mxu0 %v64
    %v171 = vpop.f32.mrb[0].mxu0
    %v172 = vadd.f32 0.0, %v171
    %v173 = vpop.f32.mrb[0].mxu0
    %174 = vmatprep.mubr.f32.mxu0 0.0
    %175 = vmatmul.mubr.f32.gmra.mrb[0].mxu0 %v65
    %v176 = vpop.f32.mrb[0].mxu0
    %v177 = vadd.f32 0.0, %v176
    %v178 = vpop.f32.mrb[0].mxu0
    %179 = vmatprep.mubr.f32.mxu0 0.0
    %180 = vmatmul.mubr.f32.gmra.mrb[0].mxu0 %v66
    %v181 = vpop.f32.mrb[0].mxu0
    %v182 = vadd.f32 0.0, %v181
    %v183 = vpop.f32.mrb[0].mxu0
    %184 = vmatprep.mubr.f32.mxu0 0.0
    %185 = vmatmul.mubr.f32.gmra.mrb[0].mxu0 %v67
    %v186 = vpop.f32.mrb[0].mxu0
    %v187 = vadd.f32 0.0, %v186
    %v188 = vpop.f32.mrb[0].mxu0
    %189 = vmatprep.mubr.f32.mxu0 0.0
    %190 = vmatmul.mubr.f32.gmra.mrb[0].mxu0 %v68
    %v191 = vpop.f32.mrb[0].mxu0
    %v192 = vadd.f32 0.0, %v191
    %v193 = vpop.f32.mrb[0].mxu0
    %194 = vmatprep.mubr.f32.mxu0 0.0
    %195 = vmatmul.mubr.f32.gmra.mrb[0].mxu0 %v69
    %v196 = vpop.f32.mrb[0].mxu0
    %v197 = vadd.f32 0.0, %v196
    %v198 = vpop.f32.mrb[0].mxu0
    %199 = vmatprep.mubr.f32.mxu0 0.0
    %200 = vmatmul.mubr.f32.gmra.mrb[0].mxu0 %v70
    %v201 = vpop.f32.mrb[0].mxu0
    %v202 = vadd.f32 0.0, %v201
    %v203 = vpop.f32.mrb[0].mxu0
    %204 = vmatprep.mubr.f32.mxu0 0.0
    %205 = vmatmul.mubr.f32.gmra.mrb[0].mxu0 %v71
    %v206 = vpop.f32.mrb[0].mxu0
    %v207 = vadd.f32 0.0, %v206
    %v208 = vpop.f32.mrb[0].mxu0
    %209 = vmatprep.mubr.f32.mxu0 0.0
    %210 = vmatmul.mubr.f32.gmra.mrb[0].mxu0 %v72
    %v211 = vpop.f32.mrb[0].mxu0
    %v212 = vadd.f32 0.0, %v211
    %v213 = vpop.f32.mrb[0].mxu0
    %214 = vmatprep.mubr.f32.mxu0 0.0
    %215 = vmatmul.mubr.f32.gmra.mrb[0].mxu0 %v73
    %v216 = vpop.f32.mrb[0].mxu0
    %v217 = vadd.f32 0.0, %v216
    %v218 = vpop.f32.mrb[0].mxu0
    %219 = vmatprep.mubr.f32.mxu0 0.0
    %220 = vmatmul.mubr.f32.gmra.mrb[0].mxu0 %v74
    %v221 = vpop.f32.mrb[0].mxu0
    %v222 = vadd.f32 0.0, %v221
    %v223 = vpop.f32.mrb[0].mxu0
    %224 = vmatprep.mubr.f32.mxu0 0.0
    %225 = vmatmul.mubr.f32.gmra.mrb[0].mxu0 %v75
    %v226 = vpop.f32.mrb[0].mxu0
    %v227 = vadd.f32 0.0, %v226
    %v228 = vpop.f32.mrb[0].mxu0
    %229 = vmatprep.mubr.f32.mxu0 0.0
    %230 = vmatmul.mubr.f32.gmra.mrb[0].mxu0 %v76
    %v231 = vpop.f32.mrb[0].mxu0
    %v232 = vadd.f32 0.0, %v231
    %v233 = vpop.f32.mrb[0].mxu0
    %234 = vmatprep.mubr.f32.mxu0 0.0
    %235 = vmatmul.mubr.f32.gmra.mrb[0].mxu0 %v77
    %v236 = vpop.f32.mrb[0].mxu0
    %v237 = vadd.f32 0.0, %v236
    %v238 = vpop.f32.mrb[0].mxu0
    %239 = vdwg.mxu0
    %v240 = vld [vmem:[#allocation2] sm:$0xff]
    %v241 = vlaneseq
    %v242 = vshrl.u32 %v241, 7
    %v243 = vsub.s32 0, %v242
    %v244 = vrot.slane %v94, %v243
    %vm245 = vcmask 64512
    %v247 = vsel %vm245, %v162, 0
    %v250 = vsel %vm245, %v167, 0
    %v253 = vsel %vm245, %v172, 0
    %v256 = vsel %vm245, %v177, 0
    %v259 = vsel %vm245, %v182, 0
    %v262 = vsel %vm245, %v187, 0
    %v265 = vsel %vm245, %v192, 0
    %v268 = vsel %vm245, %v197, 0
    %v271 = vsel %vm245, %v202, 0
    %v274 = vsel %vm245, %v207, 0
    %v277 = vsel %vm245, %v212, 0
    %v280 = vsel %vm245, %v217, 0
    %v283 = vsel %vm245, %v222, 0
    %v286 = vsel %vm245, %v227, 0
    %v289 = vsel %vm245, %v232, 0
    %v292 = vsel %vm245, %v237, 0
    %294 = vmatprep.subr.mxu0 0.0
    %295 = vmatpush1.msra.mxu0 %v240
    %296 = vmatprep.subr.mxu0 0.0
    %297 = vmatpush1.msra.mxu0 0.0
    %298 = vmatprep.subr.mxu0 0.0
    %299 = vmatpush1.msra.mxu0 0.0
    %300 = vmatprep.subr.mxu0 0.0
    %301 = vmatpush1.msra.mxu0 0.0
    %302 = vmatprep.subr.mxu0 0.0
    %303 = vmatpush1.msra.mxu0 0.0
    %304 = vmatprep.subr.mxu0 0.0
    %305 = vmatpush1.msra.mxu0 0.0
    %306 = vmatprep.subr.mxu0 0.0
    %307 = vmatpush1.msra.mxu0 0.0
    %308 = vmatprep.subr.mxu0 0.0
    %309 = vmatpush1.msra.mxu0 0.0
    %310 = vmatprep.subr.mxu0 0.0
    %311 = vmatpush1.msra.mxu0 0.0
    %312 = vmatprep.subr.mxu0 0.0
    %313 = vmatpush1.msra.mxu0 0.0
    %314 = vmatprep.subr.mxu0 0.0
    %315 = vmatpush1.msra.mxu0 0.0
    %316 = vmatprep.subr.mxu0 0.0
    %317 = vmatpush1.msra.mxu0 0.0
    %318 = vmatprep.subr.mxu0 0.0
    %319 = vmatpush1.msra.mxu0 0.0
    %320 = vmatprep.subr.mxu0 0.0
    %321 = vmatpush1.msra.mxu0 0.0
    %322 = vmatprep.subr.mxu0 0.0
    %323 = vmatpush1.msra.mxu0 0.0
    %324 = vmatprep.subr.mxu0 0.0
    %325 = vmatpush1.msra.mxu0 0.0
    %326 = vmatprep.subr.mxu0 0.0
    %327 = vmatpush1.msra.mxu0 0.0
    %328 = vmatprep.subr.mxu0 0.0
    %329 = vmatpush1.msra.mxu0 0.0
    %330 = vmatprep.subr.mxu0 0.0
    %331 = vmatpush1.msra.mxu0 0.0
    %332 = vmatprep.subr.mxu0 0.0
    %333 = vmatpush1.msra.mxu0 0.0
    %334 = vmatprep.subr.mxu0 0.0
    %335 = vmatpush1.msra.mxu0 0.0
    %336 = vmatprep.subr.mxu0 0.0
    %337 = vmatpush1.msra.mxu0 0.0
    %338 = vmatprep.subr.mxu0 0.0
    %339 = vmatpush1.msra.mxu0 0.0
    %340 = vmatprep.subr.mxu0 0.0
    %341 = vmatpush1.msra.mxu0 0.0
    %342 = vmatprep.subr.mxu0 0.0
    %343 = vmatpush1.msra.mxu0 0.0
    %344 = vmatprep.subr.mxu0 0.0
    %345 = vmatpush1.msra.mxu0 0.0
    %346 = vmatprep.subr.mxu0 0.0
    %347 = vmatpush1.msra.mxu0 0.0
    %348 = vmatprep.subr.mxu0 0.0
    %349 = vmatpush1.msra.mxu0 0.0
    %350 = vmatprep.subr.mxu0 0.0
    %351 = vmatpush1.msra.mxu0 0.0
    %352 = vmatprep.subr.mxu0 0.0
    %353 = vmatpush1.msra.mxu0 0.0
    %354 = vmatprep.subr.mxu0 0.0
    %355 = vmatpush1.msra.mxu0 0.0
    %356 = vmatprep.subr.mxu0 0.0
    %357 = vmatpush1.msra.mxu0 0.0
    %358 = vmatprep.mubr.f32.mxu0 0.0
    %359 = vmatmul.mubr.f32.gmra.mrb[0].mxu0 %v247
    %v360 = vpop.f32.mrb[0].mxu0
    %v361 = vadd.f32 %v244, %v360
    %v362 = vpop.f32.mrb[0].mxu0
    %363 = vmatprep.mubr.f32.mxu0 0.0
    %364 = vmatmul.mubr.f32.gmra.mrb[0].mxu0 %v250
    %v365 = vpop.f32.mrb[0].mxu0
    %v366 = vadd.f32 %v244, %v365
    %v367 = vpop.f32.mrb[0].mxu0
    %368 = vmatprep.mubr.f32.mxu0 0.0
    %369 = vmatmul.mubr.f32.gmra.mrb[0].mxu0 %v253
    %v370 = vpop.f32.mrb[0].mxu0
    %v371 = vadd.f32 %v244, %v370
    %v372 = vpop.f32.mrb[0].mxu0
    %373 = vmatprep.mubr.f32.mxu0 0.0
    %374 = vmatmul.mubr.f32.gmra.mrb[0].mxu0 %v256
    %v375 = vpop.f32.mrb[0].mxu0
    %v376 = vadd.f32 %v244, %v375
    %v377 = vpop.f32.mrb[0].mxu0
    %378 = vmatprep.mubr.f32.mxu0 0.0
    %379 = vmatmul.mubr.f32.gmra.mrb[0].mxu0 %v259
    %v380 = vpop.f32.mrb[0].mxu0
    %v381 = vadd.f32 %v244, %v380
    %v382 = vpop.f32.mrb[0].mxu0
    %383 = vmatprep.mubr.f32.mxu0 0.0
    %384 = vmatmul.mubr.f32.gmra.mrb[0].mxu0 %v262
    %v385 = vpop.f32.mrb[0].mxu0
    %v386 = vadd.f32 %v244, %v385
    %v387 = vpop.f32.mrb[0].mxu0
    %388 = vmatprep.mubr.f32.mxu0 0.0
    %389 = vmatmul.mubr.f32.gmra.mrb[0].mxu0 %v265
    %v390 = vpop.f32.mrb[0].mxu0
    %v391 = vadd.f32 %v244, %v390
    %v392 = vpop.f32.mrb[0].mxu0
    %393 = vmatprep.mubr.f32.mxu0 0.0
    %394 = vmatmul.mubr.f32.gmra.mrb[0].mxu0 %v268
    %v395 = vpop.f32.mrb[0].mxu0
    %v396 = vadd.f32 %v244, %v395
    %v397 = vpop.f32.mrb[0].mxu0
    %398 = vmatprep.mubr.f32.mxu0 0.0
    %399 = vmatmul.mubr.f32.gmra.mrb[0].mxu0 %v271
    %v400 = vpop.f32.mrb[0].mxu0
    %v401 = vadd.f32 %v244, %v400
    %v402 = vpop.f32.mrb[0].mxu0
    %403 = vmatprep.mubr.f32.mxu0 0.0
    %404 = vmatmul.mubr.f32.gmra.mrb[0].mxu0 %v274
    %v405 = vpop.f32.mrb[0].mxu0
    %v406 = vadd.f32 %v244, %v405
    %v407 = vpop.f32.mrb[0].mxu0
    %408 = vmatprep.mubr.f32.mxu0 0.0
    %409 = vmatmul.mubr.f32.gmra.mrb[0].mxu0 %v277
    %v410 = vpop.f32.mrb[0].mxu0
    %v411 = vadd.f32 %v244, %v410
    %v412 = vpop.f32.mrb[0].mxu0
    %413 = vmatprep.mubr.f32.mxu0 0.0
    %414 = vmatmul.mubr.f32.gmra.mrb[0].mxu0 %v280
    %v415 = vpop.f32.mrb[0].mxu0
    %v416 = vadd.f32 %v244, %v415
    %v417 = vpop.f32.mrb[0].mxu0
    %418 = vmatprep.mubr.f32.mxu0 0.0
    %419 = vmatmul.mubr.f32.gmra.mrb[0].mxu0 %v283
    %v420 = vpop.f32.mrb[0].mxu0
    %v421 = vadd.f32 %v244, %v420
    %v422 = vpop.f32.mrb[0].mxu0
    %423 = vmatprep.mubr.f32.mxu0 0.0
    %424 = vmatmul.mubr.f32.gmra.mrb[0].mxu0 %v286
    %v425 = vpop.f32.mrb[0].mxu0
    %v426 = vadd.f32 %v244, %v425
    %v427 = vpop.f32.mrb[0].mxu0
    %428 = vmatprep.mubr.f32.mxu0 0.0
    %429 = vmatmul.mubr.f32.gmra.mrb[0].mxu0 %v289
    %v430 = vpop.f32.mrb[0].mxu0
    %v431 = vadd.f32 %v244, %v430
    %v432 = vpop.f32.mrb[0].mxu0
    %433 = vmatprep.mubr.f32.mxu0 0.0
    %434 = vmatmul.mubr.f32.gmra.mrb[0].mxu0 %v292
    %v435 = vpop.f32.mrb[0].mxu0
    %v436 = vadd.f32 %v244, %v435
    %v437 = vpop.f32.mrb[0].mxu0
    %438 = vdwg.mxu0
    %v439 = vmax.f32 %v361, 0.0
    %v440 = vmax.f32 %v366, 0.0
    %v441 = vmax.f32 %v371, 0.0
    %v442 = vmax.f32 %v376, 0.0
    %v443 = vmax.f32 %v381, 0.0
    %v444 = vmax.f32 %v386, 0.0
    %v445 = vmax.f32 %v391, 0.0
    %v446 = vmax.f32 %v396, 0.0
    %v447 = vmax.f32 %v401, 0.0
    %v448 = vmax.f32 %v406, 0.0
    %v449 = vmax.f32 %v411, 0.0
    %v450 = vmax.f32 %v416, 0.0
    %v451 = vmax.f32 %v421, 0.0
    %v452 = vmax.f32 %v426, 0.0
    %v453 = vmax.f32 %v431, 0.0
    %v454 = vmax.f32 %v436, 0.0
    %v455 = vlaneseq
    %v456 = vshrl.u32 %v455, 7
    %v457 = vsub.s32 1, %v456
    %v458 = vrot.slane %v94, %v457
    %v459 = vadd.f32 %v439, %v458
    %v460 = vadd.f32 %v440, %v458
    %v461 = vadd.f32 %v441, %v458
    %v462 = vadd.f32 %v442, %v458
    %v463 = vadd.f32 %v443, %v458
    %v464 = vadd.f32 %v444, %v458
    %v465 = vadd.f32 %v445, %v458
    %v466 = vadd.f32 %v446, %v458
    %v467 = vadd.f32 %v447, %v458
    %v468 = vadd.f32 %v448, %v458
    %v469 = vadd.f32 %v449, %v458
    %v470 = vadd.f32 %v450, %v458
    %v471 = vadd.f32 %v451, %v458
    %v472 = vadd.f32 %v452, %v458
    %v473 = vadd.f32 %v453, %v458
    %v474 = vadd.f32 %v454, %v458
    %s475 = scalar_lea.vmem [#allocation5], 8
    %v476 = vld [vmem:[%s475] sm:$0xff]
    %s477 = scalar_lea.vmem [#allocation2], 32
    %v478 = vld [vmem:[%s477] sm:$0xff]
    %v479 = vld [vmem:[%s477 + $0x8] sm:$0xff]
    %v480 = vld [vmem:[%s477 + $0x10] sm:$0xff]
    %v481 = vld [vmem:[%s477 + $0x18] sm:$0xff]
    %vm482 = vcmask 261120
    %v484 = vsel %vm482, %v459, 0
    %v487 = vsel %vm482, %v460, 0
    %v490 = vsel %vm482, %v461, 0
    %v493 = vsel %vm482, %v462, 0
    %v496 = vsel %vm482, %v463, 0
    %v499 = vsel %vm482, %v464, 0
    %v502 = vsel %vm482, %v465, 0
    %v505 = vsel %vm482, %v466, 0
    %v508 = vsel %vm482, %v467, 0
    %v511 = vsel %vm482, %v468, 0
    %v514 = vsel %vm482, %v469, 0
    %v517 = vsel %vm482, %v470, 0
    %v520 = vsel %vm482, %v471, 0
    %v523 = vsel %vm482, %v472, 0
    %v526 = vsel %vm482, %v473, 0
    %v529 = vsel %vm482, %v474, 0
    %531 = vmatprep.subr.mxu0 0.0
    %532 = vmatpush1.msra.mxu0 %v478
    %533 = vmatprep.subr.mxu0 0.0
    %534 = vmatpush1.msra.mxu0 %v479
    %535 = vmatprep.subr.mxu0 0.0
    %536 = vmatpush1.msra.mxu0 %v480
    %537 = vmatprep.subr.mxu0 0.0
    %538 = vmatpush1.msra.mxu0 %v481
    %539 = vmatprep.subr.mxu0 0.0
    %540 = vmatpush1.msra.mxu0 0.0
    %541 = vmatprep.subr.mxu0 0.0
    %542 = vmatpush1.msra.mxu0 0.0
    %543 = vmatprep.subr.mxu0 0.0
    %544 = vmatpush1.msra.mxu0 0.0
    %545 = vmatprep.subr.mxu0 0.0
    %546 = vmatpush1.msra.mxu0 0.0
    %547 = vmatprep.subr.mxu0 0.0
    %548 = vmatpush1.msra.mxu0 0.0
    %549 = vmatprep.subr.mxu0 0.0
    %550 = vmatpush1.msra.mxu0 0.0
    %551 = vmatprep.subr.mxu0 0.0
    %552 = vmatpush1.msra.mxu0 0.0
    %553 = vmatprep.subr.mxu0 0.0
    %554 = vmatpush1.msra.mxu0 0.0
    %555 = vmatprep.subr.mxu0 0.0
    %556 = vmatpush1.msra.mxu0 0.0
    %557 = vmatprep.subr.mxu0 0.0
    %558 = vmatpush1.msra.mxu0 0.0
    %559 = vmatprep.subr.mxu0 0.0
    %560 = vmatpush1.msra.mxu0 0.0
    %561 = vmatprep.subr.mxu0 0.0
    %562 = vmatpush1.msra.mxu0 0.0
    %563 = vmatprep.subr.mxu0 0.0
    %564 = vmatpush1.msra.mxu0 0.0
    %565 = vmatprep.subr.mxu0 0.0
    %566 = vmatpush1.msra.mxu0 0.0
    %567 = vmatprep.subr.mxu0 0.0
    %568 = vmatpush1.msra.mxu0 0.0
    %569 = vmatprep.subr.mxu0 0.0
    %570 = vmatpush1.msra.mxu0 0.0
    %571 = vmatprep.subr.mxu0 0.0
    %572 = vmatpush1.msra.mxu0 0.0
    %573 = vmatprep.subr.mxu0 0.0
    %574 = vmatpush1.msra.mxu0 0.0
    %575 = vmatprep.subr.mxu0 0.0
    %576 = vmatpush1.msra.mxu0 0.0
    %577 = vmatprep.subr.mxu0 0.0
    %578 = vmatpush1.msra.mxu0 0.0
    %579 = vmatprep.subr.mxu0 0.0
    %580 = vmatpush1.msra.mxu0 0.0
    %581 = vmatprep.subr.mxu0 0.0
    %582 = vmatpush1.msra.mxu0 0.0
    %583 = vmatprep.subr.mxu0 0.0
    %584 = vmatpush1.msra.mxu0 0.0
    %585 = vmatprep.subr.mxu0 0.0
    %586 = vmatpush1.msra.mxu0 0.0
    %587 = vmatprep.subr.mxu0 0.0
    %588 = vmatpush1.msra.mxu0 0.0
    %589 = vmatprep.subr.mxu0 0.0
    %590 = vmatpush1.msra.mxu0 0.0
    %591 = vmatprep.subr.mxu0 0.0
    %592 = vmatpush1.msra.mxu0 0.0
    %593 = vmatprep.subr.mxu0 0.0
    %594 = vmatpush1.msra.mxu0 0.0
    %595 = vmatprep.mubr.f32.mxu0 0.0
    %596 = vmatmul.mubr.f32.gmra.mrb[0].mxu0 %v484
    %v597 = vpop.f32.mrb[0].mxu0
    %v598 = vadd.f32 0.0, %v597
    %v599 = vpop.f32.mrb[0].mxu0
    %600 = vmatprep.mubr.f32.mxu0 0.0
    %601 = vmatmul.mubr.f32.gmra.mrb[0].mxu0 %v487
    %v602 = vpop.f32.mrb[0].mxu0
    %v603 = vadd.f32 0.0, %v602
    %v604 = vpop.f32.mrb[0].mxu0
    %605 = vmatprep.mubr.f32.mxu0 0.0
    %606 = vmatmul.mubr.f32.gmra.mrb[0].mxu0 %v490
    %v607 = vpop.f32.mrb[0].mxu0
    %v608 = vadd.f32 0.0, %v607
    %v609 = vpop.f32.mrb[0].mxu0
    %610 = vmatprep.mubr.f32.mxu0 0.0
    %611 = vmatmul.mubr.f32.gmra.mrb[0].mxu0 %v493
    %v612 = vpop.f32.mrb[0].mxu0
    %v613 = vadd.f32 0.0, %v612
    %v614 = vpop.f32.mrb[0].mxu0
    %615 = vmatprep.mubr.f32.mxu0 0.0
    %616 = vmatmul.mubr.f32.gmra.mrb[0].mxu0 %v496
    %v617 = vpop.f32.mrb[0].mxu0
    %v618 = vadd.f32 0.0, %v617
    %v619 = vpop.f32.mrb[0].mxu0
    %620 = vmatprep.mubr.f32.mxu0 0.0
    %621 = vmatmul.mubr.f32.gmra.mrb[0].mxu0 %v499
    %v622 = vpop.f32.mrb[0].mxu0
    %v623 = vadd.f32 0.0, %v622
    %v624 = vpop.f32.mrb[0].mxu0
    %625 = vmatprep.mubr.f32.mxu0 0.0
    %626 = vmatmul.mubr.f32.gmra.mrb[0].mxu0 %v502
    %v627 = vpop.f32.mrb[0].mxu0
    %v628 = vadd.f32 0.0, %v627
    %v629 = vpop.f32.mrb[0].mxu0
    %630 = vmatprep.mubr.f32.mxu0 0.0
    %631 = vmatmul.mubr.f32.gmra.mrb[0].mxu0 %v505
    %v632 = vpop.f32.mrb[0].mxu0
    %v633 = vadd.f32 0.0, %v632
    %v634 = vpop.f32.mrb[0].mxu0
    %635 = vmatprep.mubr.f32.mxu0 0.0
    %636 = vmatmul.mubr.f32.gmra.mrb[0].mxu0 %v508
    %v637 = vpop.f32.mrb[0].mxu0
    %v638 = vadd.f32 0.0, %v637
    %v639 = vpop.f32.mrb[0].mxu0
    %640 = vmatprep.mubr.f32.mxu0 0.0
    %641 = vmatmul.mubr.f32.gmra.mrb[0].mxu0 %v511
    %v642 = vpop.f32.mrb[0].mxu0
    %v643 = vadd.f32 0.0, %v642
    %v644 = vpop.f32.mrb[0].mxu0
    %645 = vmatprep.mubr.f32.mxu0 0.0
    %646 = vmatmul.mubr.f32.gmra.mrb[0].mxu0 %v514
    %v647 = vpop.f32.mrb[0].mxu0
    %v648 = vadd.f32 0.0, %v647
    %v649 = vpop.f32.mrb[0].mxu0
    %650 = vmatprep.mubr.f32.mxu0 0.0
    %651 = vmatmul.mubr.f32.gmra.mrb[0].mxu0 %v517
    %v652 = vpop.f32.mrb[0].mxu0
    %v653 = vadd.f32 0.0, %v652
    %v654 = vpop.f32.mrb[0].mxu0
    %655 = vmatprep.mubr.f32.mxu0 0.0
    %656 = vmatmul.mubr.f32.gmra.mrb[0].mxu0 %v520
    %v657 = vpop.f32.mrb[0].mxu0
    %v658 = vadd.f32 0.0, %v657
    %v659 = vpop.f32.mrb[0].mxu0
    %660 = vmatprep.mubr.f32.mxu0 0.0
    %661 = vmatmul.mubr.f32.gmra.mrb[0].mxu0 %v523
    %v662 = vpop.f32.mrb[0].mxu0
    %v663 = vadd.f32 0.0, %v662
    %v664 = vpop.f32.mrb[0].mxu0
    %665 = vmatprep.mubr.f32.mxu0 0.0
    %666 = vmatmul.mubr.f32.gmra.mrb[0].mxu0 %v526
    %v667 = vpop.f32.mrb[0].mxu0
    %v668 = vadd.f32 0.0, %v667
    %v669 = vpop.f32.mrb[0].mxu0
    %670 = vmatprep.mubr.f32.mxu0 0.0
    %671 = vmatmul.mubr.f32.gmra.mrb[0].mxu0 %v529
    %v672 = vpop.f32.mrb[0].mxu0
    %v673 = vadd.f32 0.0, %v672
    %v674 = vpop.f32.mrb[0].mxu0
    %675 = vdwg.mxu0
    %v676 = vlaneseq
    %v677 = vshrl.u32 %v676, 7
    %v678 = vsub.s32 0, %v677
    %v679 = vrot.slane %v476, %v678
    %680 = vmatprep.subr.mxu0 0.0
    %681 = vmatpush1.msra.mxu0 %v598
    %682 = vmatprep.subr.mxu0 0.0
    %683 = vmatpush1.msra.mxu0 %v603
    %684 = vmatprep.subr.mxu0 0.0
    %685 = vmatpush1.msra.mxu0 %v608
    %686 = vmatprep.subr.mxu0 0.0
    %687 = vmatpush1.msra.mxu0 %v613
    %688 = vmatprep.subr.mxu0 0.0
    %689 = vmatpush1.msra.mxu0 %v618
    %690 = vmatprep.subr.mxu0 0.0
    %691 = vmatpush1.msra.mxu0 %v623
    %692 = vmatprep.subr.mxu0 0.0
    %693 = vmatpush1.msra.mxu0 %v628
    %694 = vmatprep.subr.mxu0 0.0
    %695 = vmatpush1.msra.mxu0 %v633
    %696 = vmatprep.subr.mxu0 0.0
    %697 = vmatpush1.msra.mxu0 %v638
    %698 = vmatprep.subr.mxu0 0.0
    %699 = vmatpush1.msra.mxu0 %v643
    %700 = vmatprep.subr.mxu0 0.0
    %701 = vmatpush1.msra.mxu0 %v648
    %702 = vmatprep.subr.mxu0 0.0
    %703 = vmatpush1.msra.mxu0 %v653
    %704 = vmatprep.subr.mxu0 0.0
    %705 = vmatpush1.msra.mxu0 %v658
    %706 = vmatprep.subr.mxu0 0.0
    %707 = vmatpush1.msra.mxu0 %v663
    %708 = vmatprep.subr.mxu0 0.0
    %709 = vmatpush1.msra.mxu0 %v668
    %710 = vmatprep.subr.mxu0 0.0
    %711 = vmatpush1.msra.mxu0 %v673
    %712 = vmatprep.subr.mxu0 0.0
    %713 = vmatpush1.msra.mxu0 0.0
    %714 = vmatprep.subr.mxu0 0.0
    %715 = vmatpush1.msra.mxu0 0.0
    %716 = vmatprep.subr.mxu0 0.0
    %717 = vmatpush1.msra.mxu0 0.0
    %718 = vmatprep.subr.mxu0 0.0
    %719 = vmatpush1.msra.mxu0 0.0
    %720 = vmatprep.subr.mxu0 0.0
    %721 = vmatpush1.msra.mxu0 0.0
    %722 = vmatprep.subr.mxu0 0.0
    %723 = vmatpush1.msra.mxu0 0.0
    %724 = vmatprep.subr.mxu0 0.0
    %725 = vmatpush1.msra.mxu0 0.0
    %726 = vmatprep.subr.mxu0 0.0
    %727 = vmatpush1.msra.mxu0 0.0
    %728 = vmatprep.subr.mxu0 0.0
    %729 = vmatpush1.msra.mxu0 0.0
    %730 = vmatprep.subr.mxu0 0.0
    %731 = vmatpush1.msra.mxu0 0.0
    %732 = vmatprep.subr.mxu0 0.0
    %733 = vmatpush1.msra.mxu0 0.0
    %734 = vmatprep.subr.mxu0 0.0
    %735 = vmatpush1.msra.mxu0 0.0
    %736 = vmatprep.subr.mxu0 0.0
    %737 = vmatpush1.msra.mxu0 0.0
    %738 = vmatprep.subr.mxu0 0.0
    %739 = vmatpush1.msra.mxu0 0.0
    %740 = vmatprep.subr.mxu0 0.0
    %741 = vmatpush1.msra.mxu0 0.0
    %742 = vmatprep.subr.mxu0 0.0
    %743 = vmatpush1.msra.mxu0 0.0
    %744 = vmatprep.mubr.f32.mxu0 0.0
    %745 = vmatmul.mubr.f32.gmra.mrb[0].mxu0 %v62
    %v746 = vpop.f32.mrb[0].mxu0
    %v747 = vadd.f32 %v679, %v746
    %v748 = vpop.f32.mrb[0].mxu0
    %749 = vmatprep.mubr.f32.mxu0 0.0
    %750 = vmatmul.mubr.f32.gmra.mrb[0].mxu0 %v63
    %v751 = vpop.f32.mrb[0].mxu0
    %v752 = vadd.f32 %v679, %v751
    %v753 = vpop.f32.mrb[0].mxu0
    %754 = vmatprep.mubr.f32.mxu0 0.0
    %755 = vmatmul.mubr.f32.gmra.mrb[0].mxu0 %v64
    %v756 = vpop.f32.mrb[0].mxu0
    %v757 = vadd.f32 %v679, %v756
    %v758 = vpop.f32.mrb[0].mxu0
    %759 = vmatprep.mubr.f32.mxu0 0.0
    %760 = vmatmul.mubr.f32.gmra.mrb[0].mxu0 %v65
    %v761 = vpop.f32.mrb[0].mxu0
    %v762 = vadd.f32 %v679, %v761
    %v763 = vpop.f32.mrb[0].mxu0
    %764 = vmatprep.mubr.f32.mxu0 0.0
    %765 = vmatmul.mubr.f32.gmra.mrb[0].mxu0 %v66
    %v766 = vpop.f32.mrb[0].mxu0
    %v767 = vadd.f32 %v679, %v766
    %v768 = vpop.f32.mrb[0].mxu0
    %769 = vmatprep.mubr.f32.mxu0 0.0
    %770 = vmatmul.mubr.f32.gmra.mrb[0].mxu0 %v67
    %v771 = vpop.f32.mrb[0].mxu0
    %v772 = vadd.f32 %v679, %v771
    %v773 = vpop.f32.mrb[0].mxu0
    %774 = vmatprep.mubr.f32.mxu0 0.0
    %775 = vmatmul.mubr.f32.gmra.mrb[0].mxu0 %v68
    %v776 = vpop.f32.mrb[0].mxu0
    %v777 = vadd.f32 %v679, %v776
    %v778 = vpop.f32.mrb[0].mxu0
    %779 = vmatprep.mubr.f32.mxu0 0.0
    %780 = vmatmul.mubr.f32.gmra.mrb[0].mxu0 %v69
    %v781 = vpop.f32.mrb[0].mxu0
    %v782 = vadd.f32 %v679, %v781
    %v783 = vpop.f32.mrb[0].mxu0
    %784 = vmatprep.mubr.f32.mxu0 0.0
    %785 = vmatmul.mubr.f32.gmra.mrb[0].mxu0 %v70
    %v786 = vpop.f32.mrb[0].mxu0
    %v787 = vadd.f32 %v679, %v786
    %v788 = vpop.f32.mrb[0].mxu0
    %789 = vmatprep.mubr.f32.mxu0 0.0
    %790 = vmatmul.mubr.f32.gmra.mrb[0].mxu0 %v71
    %v791 = vpop.f32.mrb[0].mxu0
    %v792 = vadd.f32 %v679, %v791
    %v793 = vpop.f32.mrb[0].mxu0
    %794 = vmatprep.mubr.f32.mxu0 0.0
    %795 = vmatmul.mubr.f32.gmra.mrb[0].mxu0 %v72
    %v796 = vpop.f32.mrb[0].mxu0
    %v797 = vadd.f32 %v679, %v796
    %v798 = vpop.f32.mrb[0].mxu0
    %799 = vmatprep.mubr.f32.mxu0 0.0
    %800 = vmatmul.mubr.f32.gmra.mrb[0].mxu0 %v73
    %v801 = vpop.f32.mrb[0].mxu0
    %v802 = vadd.f32 %v679, %v801
    %v803 = vpop.f32.mrb[0].mxu0
    %804 = vmatprep.mubr.f32.mxu0 0.0
    %805 = vmatmul.mubr.f32.gmra.mrb[0].mxu0 %v74
    %v806 = vpop.f32.mrb[0].mxu0
    %v807 = vadd.f32 %v679, %v806
    %v808 = vpop.f32.mrb[0].mxu0
    %809 = vmatprep.mubr.f32.mxu0 0.0
    %810 = vmatmul.mubr.f32.gmra.mrb[0].mxu0 %v75
    %v811 = vpop.f32.mrb[0].mxu0
    %v812 = vadd.f32 %v679, %v811
    %v813 = vpop.f32.mrb[0].mxu0
    %814 = vmatprep.mubr.f32.mxu0 0.0
    %815 = vmatmul.mubr.f32.gmra.mrb[0].mxu0 %v76
    %v816 = vpop.f32.mrb[0].mxu0
    %v817 = vadd.f32 %v679, %v816
    %v818 = vpop.f32.mrb[0].mxu0
    %819 = vmatprep.mubr.f32.mxu0 0.0
    %820 = vmatmul.mubr.f32.gmra.mrb[0].mxu0 %v77
    %v821 = vpop.f32.mrb[0].mxu0
    %v822 = vadd.f32 %v679, %v821
    %v823 = vpop.f32.mrb[0].mxu0
    %824 = vdwg.mxu0
    %v825 = vmax.f32 %v747, 0.0
    %v826 = vmax.f32 %v752, 0.0
    %v827 = vmax.f32 %v757, 0.0
    %v828 = vmax.f32 %v762, 0.0
    %v829 = vmax.f32 %v767, 0.0
    %v830 = vmax.f32 %v772, 0.0
    %v831 = vmax.f32 %v777, 0.0
    %v832 = vmax.f32 %v782, 0.0
    %v833 = vmax.f32 %v787, 0.0
    %v834 = vmax.f32 %v792, 0.0
    %v835 = vmax.f32 %v797, 0.0
    %v836 = vmax.f32 %v802, 0.0
    %v837 = vmax.f32 %v807, 0.0
    %v838 = vmax.f32 %v812, 0.0
    %v839 = vmax.f32 %v817, 0.0
    %v840 = vmax.f32 %v822, 0.0
    %v841 = vlaneseq
    %v842 = vshrl.u32 %v841, 7
    %v843 = vsub.s32 1, %v842
    %v844 = vrot.slane %v476, %v843
    %v845 = vadd.f32 %v825, %v844
    %v846 = vadd.f32 %v826, %v844
    %v847 = vadd.f32 %v827, %v844
    %v848 = vadd.f32 %v828, %v844
    %v849 = vadd.f32 %v829, %v844
    %v850 = vadd.f32 %v830, %v844
    %v851 = vadd.f32 %v831, %v844
    %v852 = vadd.f32 %v832, %v844
    %v853 = vadd.f32 %v833, %v844
    %v854 = vadd.f32 %v834, %v844
    %v855 = vadd.f32 %v835, %v844
    %v856 = vadd.f32 %v836, %v844
    %v857 = vadd.f32 %v837, %v844
    %v858 = vadd.f32 %v838, %v844
    %v859 = vadd.f32 %v839, %v844
    %v860 = vadd.f32 %v840, %v844
    %s861 = scalar_lea.vmem [#allocation5], 16
    %v862 = vld [vmem:[%s861] sm:$0xff]
    %s863 = scalar_lea.vmem [#allocation2], 64
    %v864 = vld [vmem:[%s863] sm:$0xff]
    %v865 = vld [vmem:[%s863 + $0x8] sm:$0xff]
    %v866 = vld [vmem:[%s863 + $0x10] sm:$0xff]
    %v867 = vld [vmem:[%s863 + $0x18] sm:$0xff]
    %v869 = vsel %vm482, %v845, 0
    %v872 = vsel %vm482, %v846, 0
    %v875 = vsel %vm482, %v847, 0
    %v878 = vsel %vm482, %v848, 0
    %v881 = vsel %vm482, %v849, 0
    %v884 = vsel %vm482, %v850, 0
    %v887 = vsel %vm482, %v851, 0
    %v890 = vsel %vm482, %v852, 0
    %v893 = vsel %vm482, %v853, 0
    %v896 = vsel %vm482, %v854, 0
    %v899 = vsel %vm482, %v855, 0
    %v902 = vsel %vm482, %v856, 0
    %v905 = vsel %vm482, %v857, 0
    %v908 = vsel %vm482, %v858, 0
    %v911 = vsel %vm482, %v859, 0
    %v914 = vsel %vm482, %v860, 0
    %916 = vmatprep.subr.mxu0 0.0
    %917 = vmatpush1.msra.mxu0 %v864
    %918 = vmatprep.subr.mxu0 0.0
    %919 = vmatpush1.msra.mxu0 %v865
    %920 = vmatprep.subr.mxu0 0.0
    %921 = vmatpush1.msra.mxu0 %v866
    %922 = vmatprep.subr.mxu0 0.0
    %923 = vmatpush1.msra.mxu0 %v867
    %924 = vmatprep.subr.mxu0 0.0
    %925 = vmatpush1.msra.mxu0 0.0
    %926 = vmatprep.subr.mxu0 0.0
    %927 = vmatpush1.msra.mxu0 0.0
    %928 = vmatprep.subr.mxu0 0.0
    %929 = vmatpush1.msra.mxu0 0.0
    %930 = vmatprep.subr.mxu0 0.0
    %931 = vmatpush1.msra.mxu0 0.0
    %932 = vmatprep.subr.mxu0 0.0
    %933 = vmatpush1.msra.mxu0 0.0
    %934 = vmatprep.subr.mxu0 0.0
    %935 = vmatpush1.msra.mxu0 0.0
    %936 = vmatprep.subr.mxu0 0.0
    %937 = vmatpush1.msra.mxu0 0.0
    %938 = vmatprep.subr.mxu0 0.0
    %939 = vmatpush1.msra.mxu0 0.0
    %940 = vmatprep.subr.mxu0 0.0
    %941 = vmatpush1.msra.mxu0 0.0
    %942 = vmatprep.subr.mxu0 0.0
    %943 = vmatpush1.msra.mxu0 0.0
    %944 = vmatprep.subr.mxu0 0.0
    %945 = vmatpush1.msra.mxu0 0.0
    %946 = vmatprep.subr.mxu0 0.0
    %947 = vmatpush1.msra.mxu0 0.0
    %948 = vmatprep.subr.mxu0 0.0
    %949 = vmatpush1.msra.mxu0 0.0
    %950 = vmatprep.subr.mxu0 0.0
    %951 = vmatpush1.msra.mxu0 0.0
    %952 = vmatprep.subr.mxu0 0.0
    %953 = vmatpush1.msra.mxu0 0.0
    %954 = vmatprep.subr.mxu0 0.0
    %955 = vmatpush1.msra.mxu0 0.0
    %956 = vmatprep.subr.mxu0 0.0
    %957 = vmatpush1.msra.mxu0 0.0
    %958 = vmatprep.subr.mxu0 0.0
    %959 = vmatpush1.msra.mxu0 0.0
    %960 = vmatprep.subr.mxu0 0.0
    %961 = vmatpush1.msra.mxu0 0.0
    %962 = vmatprep.subr.mxu0 0.0
    %963 = vmatpush1.msra.mxu0 0.0
    %964 = vmatprep.subr.mxu0 0.0
    %965 = vmatpush1.msra.mxu0 0.0
    %966 = vmatprep.subr.mxu0 0.0
    %967 = vmatpush1.msra.mxu0 0.0
    %968 = vmatprep.subr.mxu0 0.0
    %969 = vmatpush1.msra.mxu0 0.0
    %970 = vmatprep.subr.mxu0 0.0
    %971 = vmatpush1.msra.mxu0 0.0
    %972 = vmatprep.subr.mxu0 0.0
    %973 = vmatpush1.msra.mxu0 0.0
    %974 = vmatprep.subr.mxu0 0.0
    %975 = vmatpush1.msra.mxu0 0.0
    %976 = vmatprep.subr.mxu0 0.0
    %977 = vmatpush1.msra.mxu0 0.0
    %978 = vmatprep.subr.mxu0 0.0
    %979 = vmatpush1.msra.mxu0 0.0
    %980 = vmatprep.mubr.f32.mxu0 0.0
    %981 = vmatmul.mubr.f32.gmra.mrb[0].mxu0 %v869
    %v982 = vpop.f32.mrb[0].mxu0
    %v983 = vadd.f32 0.0, %v982
    %v984 = vpop.f32.mrb[0].mxu0
    %985 = vmatprep.mubr.f32.mxu0 0.0
    %986 = vmatmul.mubr.f32.gmra.mrb[0].mxu0 %v872
    %v987 = vpop.f32.mrb[0].mxu0
    %v988 = vadd.f32 0.0, %v987
    %v989 = vpop.f32.mrb[0].mxu0
    %990 = vmatprep.mubr.f32.mxu0 0.0
    %991 = vmatmul.mubr.f32.gmra.mrb[0].mxu0 %v875
    %v992 = vpop.f32.mrb[0].mxu0
    %v993 = vadd.f32 0.0, %v992
    %v994 = vpop.f32.mrb[0].mxu0
    %995 = vmatprep.mubr.f32.mxu0 0.0
    %996 = vmatmul.mubr.f32.gmra.mrb[0].mxu0 %v878
    %v997 = vpop.f32.mrb[0].mxu0
    %v998 = vadd.f32 0.0, %v997
    %v999 = vpop.f32.mrb[0].mxu0
    %1000 = vmatprep.mubr.f32.mxu0 0.0
    %1001 = vmatmul.mubr.f32.gmra.mrb[0].mxu0 %v881
    %v1002 = vpop.f32.mrb[0].mxu0
    %v1003 = vadd.f32 0.0, %v1002
    %v1004 = vpop.f32.mrb[0].mxu0
    %1005 = vmatprep.mubr.f32.mxu0 0.0
    %1006 = vmatmul.mubr.f32.gmra.mrb[0].mxu0 %v884
    %v1007 = vpop.f32.mrb[0].mxu0
    %v1008 = vadd.f32 0.0, %v1007
    %v1009 = vpop.f32.mrb[0].mxu0
    %1010 = vmatprep.mubr.f32.mxu0 0.0
    %1011 = vmatmul.mubr.f32.gmra.mrb[0].mxu0 %v887
    %v1012 = vpop.f32.mrb[0].mxu0
    %v1013 = vadd.f32 0.0, %v1012
    %v1014 = vpop.f32.mrb[0].mxu0
    %1015 = vmatprep.mubr.f32.mxu0 0.0
    %1016 = vmatmul.mubr.f32.gmra.mrb[0].mxu0 %v890
    %v1017 = vpop.f32.mrb[0].mxu0
    %v1018 = vadd.f32 0.0, %v1017
    %v1019 = vpop.f32.mrb[0].mxu0
    %1020 = vmatprep.mubr.f32.mxu0 0.0
    %1021 = vmatmul.mubr.f32.gmra.mrb[0].mxu0 %v893
    %v1022 = vpop.f32.mrb[0].mxu0
    %v1023 = vadd.f32 0.0, %v1022
    %v1024 = vpop.f32.mrb[0].mxu0
    %1025 = vmatprep.mubr.f32.mxu0 0.0
    %1026 = vmatmul.mubr.f32.gmra.mrb[0].mxu0 %v896
    %v1027 = vpop.f32.mrb[0].mxu0
    %v1028 = vadd.f32 0.0, %v1027
    %v1029 = vpop.f32.mrb[0].mxu0
    %1030 = vmatprep.mubr.f32.mxu0 0.0
    %1031 = vmatmul.mubr.f32.gmra.mrb[0].mxu0 %v899
    %v1032 = vpop.f32.mrb[0].mxu0
    %v1033 = vadd.f32 0.0, %v1032
    %v1034 = vpop.f32.mrb[0].mxu0
    %1035 = vmatprep.mubr.f32.mxu0 0.0
    %1036 = vmatmul.mubr.f32.gmra.mrb[0].mxu0 %v902
    %v1037 = vpop.f32.mrb[0].mxu0
    %v1038 = vadd.f32 0.0, %v1037
    %v1039 = vpop.f32.mrb[0].mxu0
    %1040 = vmatprep.mubr.f32.mxu0 0.0
    %1041 = vmatmul.mubr.f32.gmra.mrb[0].mxu0 %v905
    %v1042 = vpop.f32.mrb[0].mxu0
    %v1043 = vadd.f32 0.0, %v1042
    %v1044 = vpop.f32.mrb[0].mxu0
    %1045 = vmatprep.mubr.f32.mxu0 0.0
    %1046 = vmatmul.mubr.f32.gmra.mrb[0].mxu0 %v908
    %v1047 = vpop.f32.mrb[0].mxu0
    %v1048 = vadd.f32 0.0, %v1047
    %v1049 = vpop.f32.mrb[0].mxu0
    %1050 = vmatprep.mubr.f32.mxu0 0.0
    %1051 = vmatmul.mubr.f32.gmra.mrb[0].mxu0 %v911
    %v1052 = vpop.f32.mrb[0].mxu0
    %v1053 = vadd.f32 0.0, %v1052
    %v1054 = vpop.f32.mrb[0].mxu0
    %1055 = vmatprep.mubr.f32.mxu0 0.0
    %1056 = vmatmul.mubr.f32.gmra.mrb[0].mxu0 %v914
    %v1057 = vpop.f32.mrb[0].mxu0
    %v1058 = vadd.f32 0.0, %v1057
    %v1059 = vpop.f32.mrb[0].mxu0
    %1060 = vdwg.mxu0
    %v1061 = vlaneseq
    %v1062 = vshrl.u32 %v1061, 7
    %v1063 = vsub.s32 0, %v1062
    %v1064 = vrot.slane %v862, %v1063
    %1065 = vmatprep.subr.mxu0 0.0
    %1066 = vmatpush1.msra.mxu0 %v983
    %1067 = vmatprep.subr.mxu0 0.0
    %1068 = vmatpush1.msra.mxu0 %v988
    %1069 = vmatprep.subr.mxu0 0.0
    %1070 = vmatpush1.msra.mxu0 %v993
    %1071 = vmatprep.subr.mxu0 0.0
    %1072 = vmatpush1.msra.mxu0 %v998
    %1073 = vmatprep.subr.mxu0 0.0
    %1074 = vmatpush1.msra.mxu0 %v1003
    %1075 = vmatprep.subr.mxu0 0.0
    %1076 = vmatpush1.msra.mxu0 %v1008
    %1077 = vmatprep.subr.mxu0 0.0
    %1078 = vmatpush1.msra.mxu0 %v1013
    %1079 = vmatprep.subr.mxu0 0.0
    %1080 = vmatpush1.msra.mxu0 %v1018
    %1081 = vmatprep.subr.mxu0 0.0
    %1082 = vmatpush1.msra.mxu0 %v1023
    %1083 = vmatprep.subr.mxu0 0.0
    %1084 = vmatpush1.msra.mxu0 %v1028
    %1085 = vmatprep.subr.mxu0 0.0
    %1086 = vmatpush1.msra.mxu0 %v1033
    %1087 = vmatprep.subr.mxu0 0.0
    %1088 = vmatpush1.msra.mxu0 %v1038
    %1089 = vmatprep.subr.mxu0 0.0
    %1090 = vmatpush1.msra.mxu0 %v1043
    %1091 = vmatprep.subr.mxu0 0.0
    %1092 = vmatpush1.msra.mxu0 %v1048
    %1093 = vmatprep.subr.mxu0 0.0
    %1094 = vmatpush1.msra.mxu0 %v1053
    %1095 = vmatprep.subr.mxu0 0.0
    %1096 = vmatpush1.msra.mxu0 %v1058
    %1097 = vmatprep.subr.mxu0 0.0
    %1098 = vmatpush1.msra.mxu0 0.0
    %1099 = vmatprep.subr.mxu0 0.0
    %1100 = vmatpush1.msra.mxu0 0.0
    %1101 = vmatprep.subr.mxu0 0.0
    %1102 = vmatpush1.msra.mxu0 0.0
    %1103 = vmatprep.subr.mxu0 0.0
    %1104 = vmatpush1.msra.mxu0 0.0
    %1105 = vmatprep.subr.mxu0 0.0
    %1106 = vmatpush1.msra.mxu0 0.0
    %1107 = vmatprep.subr.mxu0 0.0
    %1108 = vmatpush1.msra.mxu0 0.0
    %1109 = vmatprep.subr.mxu0 0.0
    %1110 = vmatpush1.msra.mxu0 0.0
    %1111 = vmatprep.subr.mxu0 0.0
    %1112 = vmatpush1.msra.mxu0 0.0
    %1113 = vmatprep.subr.mxu0 0.0
    %1114 = vmatpush1.msra.mxu0 0.0
    %1115 = vmatprep.subr.mxu0 0.0
    %1116 = vmatpush1.msra.mxu0 0.0
    %1117 = vmatprep.subr.mxu0 0.0
    %1118 = vmatpush1.msra.mxu0 0.0
    %1119 = vmatprep.subr.mxu0 0.0
    %1120 = vmatpush1.msra.mxu0 0.0
    %1121 = vmatprep.subr.mxu0 0.0
    %1122 = vmatpush1.msra.mxu0 0.0
    %1123 = vmatprep.subr.mxu0 0.0
    %1124 = vmatpush1.msra.mxu0 0.0
    %1125 = vmatprep.subr.mxu0 0.0
    %1126 = vmatpush1.msra.mxu0 0.0
    %1127 = vmatprep.subr.mxu0 0.0
    %1128 = vmatpush1.msra.mxu0 0.0
    %1129 = vmatprep.mubr.f32.mxu0 0.0
    %1130 = vmatmul.mubr.f32.gmra.mrb[0].mxu0 %v62
    %v1131 = vpop.f32.mrb[0].mxu0
    %v1132 = vadd.f32 %v1064, %v1131
    %v1133 = vpop.f32.mrb[0].mxu0
    %1134 = vmatprep.mubr.f32.mxu0 0.0
    %1135 = vmatmul.mubr.f32.gmra.mrb[0].mxu0 %v63
    %v1136 = vpop.f32.mrb[0].mxu0
    %v1137 = vadd.f32 %v1064, %v1136
    %v1138 = vpop.f32.mrb[0].mxu0
    %1139 = vmatprep.mubr.f32.mxu0 0.0
    %1140 = vmatmul.mubr.f32.gmra.mrb[0].mxu0 %v64
    %v1141 = vpop.f32.mrb[0].mxu0
    %v1142 = vadd.f32 %v1064, %v1141
    %v1143 = vpop.f32.mrb[0].mxu0
    %1144 = vmatprep.mubr.f32.mxu0 0.0
    %1145 = vmatmul.mubr.f32.gmra.mrb[0].mxu0 %v65
    %v1146 = vpop.f32.mrb[0].mxu0
    %v1147 = vadd.f32 %v1064, %v1146
    %v1148 = vpop.f32.mrb[0].mxu0
    %1149 = vmatprep.mubr.f32.mxu0 0.0
    %1150 = vmatmul.mubr.f32.gmra.mrb[0].mxu0 %v66
    %v1151 = vpop.f32.mrb[0].mxu0
    %v1152 = vadd.f32 %v1064, %v1151
    %v1153 = vpop.f32.mrb[0].mxu0
    %1154 = vmatprep.mubr.f32.mxu0 0.0
    %1155 = vmatmul.mubr.f32.gmra.mrb[0].mxu0 %v67
    %v1156 = vpop.f32.mrb[0].mxu0
    %v1157 = vadd.f32 %v1064, %v1156
    %v1158 = vpop.f32.mrb[0].mxu0
    %1159 = vmatprep.mubr.f32.mxu0 0.0
    %1160 = vmatmul.mubr.f32.gmra.mrb[0].mxu0 %v68
    %v1161 = vpop.f32.mrb[0].mxu0
    %v1162 = vadd.f32 %v1064, %v1161
    %v1163 = vpop.f32.mrb[0].mxu0
    %1164 = vmatprep.mubr.f32.mxu0 0.0
    %1165 = vmatmul.mubr.f32.gmra.mrb[0].mxu0 %v69
    %v1166 = vpop.f32.mrb[0].mxu0
    %v1167 = vadd.f32 %v1064, %v1166
    %v1168 = vpop.f32.mrb[0].mxu0
    %1169 = vmatprep.mubr.f32.mxu0 0.0
    %1170 = vmatmul.mubr.f32.gmra.mrb[0].mxu0 %v70
    %v1171 = vpop.f32.mrb[0].mxu0
    %v1172 = vadd.f32 %v1064, %v1171
    %v1173 = vpop.f32.mrb[0].mxu0
    %1174 = vmatprep.mubr.f32.mxu0 0.0
    %1175 = vmatmul.mubr.f32.gmra.mrb[0].mxu0 %v71
    %v1176 = vpop.f32.mrb[0].mxu0
    %v1177 = vadd.f32 %v1064, %v1176
    %v1178 = vpop.f32.mrb[0].mxu0
    %1179 = vmatprep.mubr.f32.mxu0 0.0
    %1180 = vmatmul.mubr.f32.gmra.mrb[0].mxu0 %v72
    %v1181 = vpop.f32.mrb[0].mxu0
    %v1182 = vadd.f32 %v1064, %v1181
    %v1183 = vpop.f32.mrb[0].mxu0
    %1184 = vmatprep.mubr.f32.mxu0 0.0
    %1185 = vmatmul.mubr.f32.gmra.mrb[0].mxu0 %v73
    %v1186 = vpop.f32.mrb[0].mxu0
    %v1187 = vadd.f32 %v1064, %v1186
    %v1188 = vpop.f32.mrb[0].mxu0
    %1189 = vmatprep.mubr.f32.mxu0 0.0
    %1190 = vmatmul.mubr.f32.gmra.mrb[0].mxu0 %v74
    %v1191 = vpop.f32.mrb[0].mxu0
    %v1192 = vadd.f32 %v1064, %v1191
    %v1193 = vpop.f32.mrb[0].mxu0
    %1194 = vmatprep.mubr.f32.mxu0 0.0
    %1195 = vmatmul.mubr.f32.gmra.mrb[0].mxu0 %v75
    %v1196 = vpop.f32.mrb[0].mxu0
    %v1197 = vadd.f32 %v1064, %v1196
    %v1198 = vpop.f32.mrb[0].mxu0
    %1199 = vmatprep.mubr.f32.mxu0 0.0
    %1200 = vmatmul.mubr.f32.gmra.mrb[0].mxu0 %v76
    %v1201 = vpop.f32.mrb[0].mxu0
    %v1202 = vadd.f32 %v1064, %v1201
    %v1203 = vpop.f32.mrb[0].mxu0
    %1204 = vmatprep.mubr.f32.mxu0 0.0
    %1205 = vmatmul.mubr.f32.gmra.mrb[0].mxu0 %v77
    %v1206 = vpop.f32.mrb[0].mxu0
    %v1207 = vadd.f32 %v1064, %v1206
    %v1208 = vpop.f32.mrb[0].mxu0
    %1209 = vdwg.mxu0
    %v1210 = vmax.f32 %v1132, 0.0
    %v1211 = vmax.f32 %v1137, 0.0
    %v1212 = vmax.f32 %v1142, 0.0
    %v1213 = vmax.f32 %v1147, 0.0
    %v1214 = vmax.f32 %v1152, 0.0
    %v1215 = vmax.f32 %v1157, 0.0
    %v1216 = vmax.f32 %v1162, 0.0
    %v1217 = vmax.f32 %v1167, 0.0
    %v1218 = vmax.f32 %v1172, 0.0
    %v1219 = vmax.f32 %v1177, 0.0
    %v1220 = vmax.f32 %v1182, 0.0
    %v1221 = vmax.f32 %v1187, 0.0
    %v1222 = vmax.f32 %v1192, 0.0
    %v1223 = vmax.f32 %v1197, 0.0
    %v1224 = vmax.f32 %v1202, 0.0
    %v1225 = vmax.f32 %v1207, 0.0
    %v1226 = vlaneseq
    %v1227 = vshrl.u32 %v1226, 7
    %v1228 = vsub.s32 1, %v1227
    %v1229 = vrot.slane %v862, %v1228
    %v1230 = vadd.f32 %v1210, %v1229
    %v1231 = vadd.f32 %v1211, %v1229
    %v1232 = vadd.f32 %v1212, %v1229
    %v1233 = vadd.f32 %v1213, %v1229
    %v1234 = vadd.f32 %v1214, %v1229
    %v1235 = vadd.f32 %v1215, %v1229
    %v1236 = vadd.f32 %v1216, %v1229
    %v1237 = vadd.f32 %v1217, %v1229
    %v1238 = vadd.f32 %v1218, %v1229
    %v1239 = vadd.f32 %v1219, %v1229
    %v1240 = vadd.f32 %v1220, %v1229
    %v1241 = vadd.f32 %v1221, %v1229
    %v1242 = vadd.f32 %v1222, %v1229
    %v1243 = vadd.f32 %v1223, %v1229
    %v1244 = vadd.f32 %v1224, %v1229
    %v1245 = vadd.f32 %v1225, %v1229
    %v1246 = vsel %vm482, %v1230, -inf
    %v1247 = vrot.slane %v1246, 4
    %v1248 = vmax.f32 %v1246, %v1247
    %v1249 = vrot.slane %v1248, 2
    %v1250 = vmax.f32 %v1248, %v1249
    %v1251 = vrot.slane %v1250, 1
    %v1252 = vmax.f32 %v1250, %v1251
    %v1253 = vsel %vm482, %v1231, -inf
    %v1254 = vrot.slane %v1253, 4
    %v1255 = vmax.f32 %v1253, %v1254
    %v1256 = vrot.slane %v1255, 2
    %v1257 = vmax.f32 %v1255, %v1256
    %v1258 = vrot.slane %v1257, 1
    %v1259 = vmax.f32 %v1257, %v1258
    %v1260 = vsel %vm482, %v1232, -inf
    %v1261 = vrot.slane %v1260, 4
    %v1262 = vmax.f32 %v1260, %v1261
    %v1263 = vrot.slane %v1262, 2
    %v1264 = vmax.f32 %v1262, %v1263
    %v1265 = vrot.slane %v1264, 1
    %v1266 = vmax.f32 %v1264, %v1265
    %v1267 = vsel %vm482, %v1233, -inf
    %v1268 = vrot.slane %v1267, 4
    %v1269 = vmax.f32 %v1267, %v1268
    %v1270 = vrot.slane %v1269, 2
    %v1271 = vmax.f32 %v1269, %v1270
    %v1272 = vrot.slane %v1271, 1
    %v1273 = vmax.f32 %v1271, %v1272
    %v1274 = vsel %vm482, %v1234, -inf
    %v1275 = vrot.slane %v1274, 4
    %v1276 = vmax.f32 %v1274, %v1275
    %v1277 = vrot.slane %v1276, 2
    %v1278 = vmax.f32 %v1276, %v1277
    %v1279 = vrot.slane %v1278, 1
    %v1280 = vmax.f32 %v1278, %v1279
    %v1281 = vsel %vm482, %v1235, -inf
    %v1282 = vrot.slane %v1281, 4
    %v1283 = vmax.f32 %v1281, %v1282
    %v1284 = vrot.slane %v1283, 2
    %v1285 = vmax.f32 %v1283, %v1284
    %v1286 = vrot.slane %v1285, 1
    %v1287 = vmax.f32 %v1285, %v1286
    %v1288 = vsel %vm482, %v1236, -inf
    %v1289 = vrot.slane %v1288, 4
    %v1290 = vmax.f32 %v1288, %v1289
    %v1291 = vrot.slane %v1290, 2
    %v1292 = vmax.f32 %v1290, %v1291
    %v1293 = vrot.slane %v1292, 1
    %v1294 = vmax.f32 %v1292, %v1293
    %v1295 = vsel %vm482, %v1237, -inf
    %v1296 = vrot.slane %v1295, 4
    %v1297 = vmax.f32 %v1295, %v1296
    %v1298 = vrot.slane %v1297, 2
    %v1299 = vmax.f32 %v1297, %v1298
    %v1300 = vrot.slane %v1299, 1
    %v1301 = vmax.f32 %v1299, %v1300
    %v1302 = vsel %vm482, %v1238, -inf
    %v1303 = vrot.slane %v1302, 4
    %v1304 = vmax.f32 %v1302, %v1303
    %v1305 = vrot.slane %v1304, 2
    %v1306 = vmax.f32 %v1304, %v1305
    %v1307 = vrot.slane %v1306, 1
    %v1308 = vmax.f32 %v1306, %v1307
    %v1309 = vsel %vm482, %v1239, -inf
    %v1310 = vrot.slane %v1309, 4
    %v1311 = vmax.f32 %v1309, %v1310
    %v1312 = vrot.slane %v1311, 2
    %v1313 = vmax.f32 %v1311, %v1312
    %v1314 = vrot.slane %v1313, 1
    %v1315 = vmax.f32 %v1313, %v1314
    %v1316 = vsel %vm482, %v1240, -inf
    %v1317 = vrot.slane %v1316, 4
    %v1318 = vmax.f32 %v1316, %v1317
    %v1319 = vrot.slane %v1318, 2
    %v1320 = vmax.f32 %v1318, %v1319
    %v1321 = vrot.slane %v1320, 1
    %v1322 = vmax.f32 %v1320, %v1321
    %v1323 = vsel %vm482, %v1241, -inf
    %v1324 = vrot.slane %v1323, 4
    %v1325 = vmax.f32 %v1323, %v1324
    %v1326 = vrot.slane %v1325, 2
    %v1327 = vmax.f32 %v1325, %v1326
    %v1328 = vrot.slane %v1327, 1
    %v1329 = vmax.f32 %v1327, %v1328
    %v1330 = vsel %vm482, %v1242, -inf
    %v1331 = vrot.slane %v1330, 4
    %v1332 = vmax.f32 %v1330, %v1331
    %v1333 = vrot.slane %v1332, 2
    %v1334 = vmax.f32 %v1332, %v1333
    %v1335 = vrot.slane %v1334, 1
    %v1336 = vmax.f32 %v1334, %v1335
    %v1337 = vsel %vm482, %v1243, -inf
    %v1338 = vrot.slane %v1337, 4
    %v1339 = vmax.f32 %v1337, %v1338
    %v1340 = vrot.slane %v1339, 2
    %v1341 = vmax.f32 %v1339, %v1340
    %v1342 = vrot.slane %v1341, 1
    %v1343 = vmax.f32 %v1341, %v1342
    %v1344 = vsel %vm482, %v1244, -inf
    %v1345 = vrot.slane %v1344, 4
    %v1346 = vmax.f32 %v1344, %v1345
    %v1347 = vrot.slane %v1346, 2
    %v1348 = vmax.f32 %v1346, %v1347
    %v1349 = vrot.slane %v1348, 1
    %v1350 = vmax.f32 %v1348, %v1349
    %v1351 = vsel %vm482, %v1245, -inf
    %v1352 = vrot.slane %v1351, 4
    %v1353 = vmax.f32 %v1351, %v1352
    %v1354 = vrot.slane %v1353, 2
    %v1355 = vmax.f32 %v1353, %v1354
    %v1356 = vrot.slane %v1355, 1
    %v1357 = vmax.f32 %v1355, %v1356
    %v1358 = vld [vmem:[#allocation7] sm:$0xff]
    %v1359 = vld [vmem:[#allocation7 + $0x8] sm:$0xff]
    %v1360 = vld [vmem:[#allocation7 + $0x10] sm:$0xff]
    %v1361 = vld [vmem:[#allocation7 + $0x18] sm:$0xff]
    %v1362 = vld [vmem:[#allocation7 + $0x20] sm:$0x1]
    %v1363 = vld [vmem:[#allocation7 + $0x28] sm:$0xff]
    %v1364 = vld [vmem:[#allocation7 + $0x30] sm:$0xff]
    %v1365 = vld [vmem:[#allocation7 + $0x38] sm:$0xff]
    %v1366 = vld [vmem:[#allocation7 + $0x40] sm:$0xff]
    %v1367 = vld [vmem:[#allocation7 + $0x48] sm:$0xff]
    %v1368 = vld [vmem:[#allocation7 + $0x50] sm:$0xff]
    %v1369 = vld [vmem:[#allocation7 + $0x58] sm:$0xff]
    %v1370 = vld [vmem:[#allocation7 + $0x60] sm:$0xff]
    %v1371 = vld [vmem:[#allocation7 + $0x68] sm:$0xff]
    %v1372 = vld [vmem:[#allocation7 + $0x70] sm:$0xff]
    %v1373 = vld [vmem:[#allocation7 + $0x78] sm:$0xff]
    %v1374 = vld [vmem:[#allocation7 + $0x80] sm:$0xff]
    %v1375 = vld [vmem:[#allocation7 + $0x88] sm:$0xff]
    %v1376 = vld [vmem:[#allocation7 + $0x90] sm:$0xff]
    %v1377 = vld [vmem:[#allocation7 + $0x98] sm:$0xff]
    %v1378 = vld [vmem:[#allocation7 + $0xa0] sm:$0xff]
    %v1379 = vld [vmem:[#allocation7 + $0xa8] sm:$0x1]
    %v1380 = vlaneseq
    %v1381 = vshrl.u32 %v1380, 7
    %v1382 = vsub.s32 0, %v1381
    %v1383 = vrot.slane %v1362, %v1382
    %vm1400 = vcmask 1041409
    %v1401 = vsel %vm1400, %v1259, %v1252
    %vm1402 = vcmask 1042434
    %v1403 = vsel %vm1402, %v1266, %v1401
    %vm1404 = vcmask 1043459
    %v1405 = vsel %vm1404, %v1273, %v1403
    %vm1406 = vcmask 1044484
    %v1407 = vsel %vm1406, %v1280, %v1405
    %vm1408 = vcmask 1045509
    %v1409 = vsel %vm1408, %v1287, %v1407
    %vm1410 = vcmask 1046534
    %v1411 = vsel %vm1410, %v1294, %v1409
    %vm1412 = vcmask 1047559
    %v1413 = vsel %vm1412, %v1301, %v1411
    %v1414 = vsel %vm1400, %v1315, %v1308
    %v1415 = vsel %vm1402, %v1322, %v1414
    %v1416 = vsel %vm1404, %v1329, %v1415
    %v1417 = vsel %vm1406, %v1336, %v1416
    %v1418 = vsel %vm1408, %v1343, %v1417
    %v1419 = vsel %vm1410, %v1350, %v1418
    %v1420 = vsel %vm1412, %v1357, %v1419
    %v1421 = vsel %vm482, %v1413, 0
    %v1423 = vsel %vm482, %v1420, 0
    %1425 = vmatprep.subr.mxu0 0.0
    %1426 = vmatpush1.msra.mxu0 %v1358
    %1427 = vmatprep.subr.mxu0 0.0
    %1428 = vmatpush1.msra.mxu0 %v1359
    %1429 = vmatprep.subr.mxu0 0.0
    %1430 = vmatpush1.msra.mxu0 %v1360
    %1431 = vmatprep.subr.mxu0 0.0
    %1432 = vmatpush1.msra.mxu0 %v1361
    %1433 = vmatprep.subr.mxu0 0.0
    %1434 = vmatpush1.msra.mxu0 0.0
    %1435 = vmatprep.subr.mxu0 0.0
    %1436 = vmatpush1.msra.mxu0 0.0
    %1437 = vmatprep.subr.mxu0 0.0
    %1438 = vmatpush1.msra.mxu0 0.0
    %1439 = vmatprep.subr.mxu0 0.0
    %1440 = vmatpush1.msra.mxu0 0.0
    %1441 = vmatprep.subr.mxu0 0.0
    %1442 = vmatpush1.msra.mxu0 0.0
    %1443 = vmatprep.subr.mxu0 0.0
    %1444 = vmatpush1.msra.mxu0 0.0
    %1445 = vmatprep.subr.mxu0 0.0
    %1446 = vmatpush1.msra.mxu0 0.0
    %1447 = vmatprep.subr.mxu0 0.0
    %1448 = vmatpush1.msra.mxu0 0.0
    %1449 = vmatprep.subr.mxu0 0.0
    %1450 = vmatpush1.msra.mxu0 0.0
    %1451 = vmatprep.subr.mxu0 0.0
    %1452 = vmatpush1.msra.mxu0 0.0
    %1453 = vmatprep.subr.mxu0 0.0
    %1454 = vmatpush1.msra.mxu0 0.0
    %1455 = vmatprep.subr.mxu0 0.0
    %1456 = vmatpush1.msra.mxu0 0.0
    %1457 = vmatprep.subr.mxu0 0.0
    %1458 = vmatpush1.msra.mxu0 0.0
    %1459 = vmatprep.subr.mxu0 0.0
    %1460 = vmatpush1.msra.mxu0 0.0
    %1461 = vmatprep.subr.mxu0 0.0
    %1462 = vmatpush1.msra.mxu0 0.0
    %1463 = vmatprep.subr.mxu0 0.0
    %1464 = vmatpush1.msra.mxu0 0.0
    %1465 = vmatprep.subr.mxu0 0.0
    %1466 = vmatpush1.msra.mxu0 0.0
    %1467 = vmatprep.subr.mxu0 0.0
    %1468 = vmatpush1.msra.mxu0 0.0
    %1469 = vmatprep.subr.mxu0 0.0
    %1470 = vmatpush1.msra.mxu0 0.0
    %1471 = vmatprep.subr.mxu0 0.0
    %1472 = vmatpush1.msra.mxu0 0.0
    %1473 = vmatprep.subr.mxu0 0.0
    %1474 = vmatpush1.msra.mxu0 0.0
    %1475 = vmatprep.subr.mxu0 0.0
    %1476 = vmatpush1.msra.mxu0 0.0
    %1477 = vmatprep.subr.mxu0 0.0
    %1478 = vmatpush1.msra.mxu0 0.0
    %1479 = vmatprep.subr.mxu0 0.0
    %1480 = vmatpush1.msra.mxu0 0.0
    %1481 = vmatprep.subr.mxu0 0.0
    %1482 = vmatpush1.msra.mxu0 0.0
    %1483 = vmatprep.subr.mxu0 0.0
    %1484 = vmatpush1.msra.mxu0 0.0
    %1485 = vmatprep.subr.mxu0 0.0
    %1486 = vmatpush1.msra.mxu0 0.0
    %1487 = vmatprep.subr.mxu0 0.0
    %1488 = vmatpush1.msra.mxu0 0.0
    %1489 = vmatprep.mubr.f32.mxu0 0.0
    %1490 = vmatmul.mubr.f32.gmra.mrb[0].mxu0 %v1421
    %v1491 = vpop.f32.mrb[0].mxu0
    %v1492 = vadd.f32 %v1383, %v1491
    %v1493 = vpop.f32.mrb[0].mxu0
    %1494 = vmatprep.mubr.f32.mxu0 0.0
    %1495 = vmatmul.mubr.f32.gmra.mrb[0].mxu0 %v1423
    %v1496 = vpop.f32.mrb[0].mxu0
    %v1497 = vadd.f32 %v1383, %v1496
    %v1498 = vpop.f32.mrb[0].mxu0
    %1499 = vdwg.mxu0
    %v1500 = vmax.f32 %v1492, 0.0
    %v1501 = vmax.f32 %v1497, 0.0
    %v1502 = vlaneseq
    %v1503 = vshrl.u32 %v1502, 7
    %v1504 = vsub.s32 0, %v1503
    %v1505 = vrot.slane %v1379, %v1504
    %1506 = vmatprep.subr.mxu0 0.0
    %1507 = vmatpush1.msra.mxu0 %v1363
    %1508 = vmatprep.subr.mxu0 0.0
    %1509 = vmatpush1.msra.mxu0 %v1364
    %1510 = vmatprep.subr.mxu0 0.0
    %1511 = vmatpush1.msra.mxu0 %v1365
    %1512 = vmatprep.subr.mxu0 0.0
    %1513 = vmatpush1.msra.mxu0 %v1366
    %1514 = vmatprep.subr.mxu0 0.0
    %1515 = vmatpush1.msra.mxu0 %v1367
    %1516 = vmatprep.subr.mxu0 0.0
    %1517 = vmatpush1.msra.mxu0 %v1368
    %1518 = vmatprep.subr.mxu0 0.0
    %1519 = vmatpush1.msra.mxu0 %v1369
    %1520 = vmatprep.subr.mxu0 0.0
    %1521 = vmatpush1.msra.mxu0 %v1370
    %1522 = vmatprep.subr.mxu0 0.0
    %1523 = vmatpush1.msra.mxu0 %v1371
    %1524 = vmatprep.subr.mxu0 0.0
    %1525 = vmatpush1.msra.mxu0 %v1372
    %1526 = vmatprep.subr.mxu0 0.0
    %1527 = vmatpush1.msra.mxu0 %v1373
    %1528 = vmatprep.subr.mxu0 0.0
    %1529 = vmatpush1.msra.mxu0 %v1374
    %1530 = vmatprep.subr.mxu0 0.0
    %1531 = vmatpush1.msra.mxu0 %v1375
    %1532 = vmatprep.subr.mxu0 0.0
    %1533 = vmatpush1.msra.mxu0 %v1376
    %1534 = vmatprep.subr.mxu0 0.0
    %1535 = vmatpush1.msra.mxu0 %v1377
    %1536 = vmatprep.subr.mxu0 0.0
    %1537 = vmatpush1.msra.mxu0 %v1378
    %1538 = vmatprep.subr.mxu0 0.0
    %1539 = vmatpush1.msra.mxu0 0.0
    %1540 = vmatprep.subr.mxu0 0.0
    %1541 = vmatpush1.msra.mxu0 0.0
    %1542 = vmatprep.subr.mxu0 0.0
    %1543 = vmatpush1.msra.mxu0 0.0
    %1544 = vmatprep.subr.mxu0 0.0
    %1545 = vmatpush1.msra.mxu0 0.0
    %1546 = vmatprep.subr.mxu0 0.0
    %1547 = vmatpush1.msra.mxu0 0.0
    %1548 = vmatprep.subr.mxu0 0.0
    %1549 = vmatpush1.msra.mxu0 0.0
    %1550 = vmatprep.subr.mxu0 0.0
    %1551 = vmatpush1.msra.mxu0 0.0
    %1552 = vmatprep.subr.mxu0 0.0
    %1553 = vmatpush1.msra.mxu0 0.0
    %1554 = vmatprep.subr.mxu0 0.0
    %1555 = vmatpush1.msra.mxu0 0.0
    %1556 = vmatprep.subr.mxu0 0.0
    %1557 = vmatpush1.msra.mxu0 0.0
    %1558 = vmatprep.subr.mxu0 0.0
    %1559 = vmatpush1.msra.mxu0 0.0
    %1560 = vmatprep.subr.mxu0 0.0
    %1561 = vmatpush1.msra.mxu0 0.0
    %1562 = vmatprep.subr.mxu0 0.0
    %1563 = vmatpush1.msra.mxu0 0.0
    %1564 = vmatprep.subr.mxu0 0.0
    %1565 = vmatpush1.msra.mxu0 0.0
    %1566 = vmatprep.subr.mxu0 0.0
    %1567 = vmatpush1.msra.mxu0 0.0
    %1568 = vmatprep.subr.mxu0 0.0
    %1569 = vmatpush1.msra.mxu0 0.0
    %1570 = vmatprep.mubr.f32.mxu0 0.0
    %1571 = vmatmul.mubr.f32.gmra.mrb[0].mxu0 %v1500
    %v1572 = vpop.f32.mrb[0].mxu0
    %v1573 = vadd.f32 %v1505, %v1572
    %v1574 = vpop.f32.mrb[0].mxu0
    %1575 = vmatprep.mubr.f32.mxu0 0.0
    %1576 = vmatmul.mubr.f32.gmra.mrb[0].mxu0 %v1501
    %v1577 = vpop.f32.mrb[0].mxu0
    %v1578 = vadd.f32 %v1505, %v1577
    %v1579 = vpop.f32.mrb[0].mxu0
    %1580 = vdwg.mxu0
    %1581 = vst [vmem:[#allocation8] sm:$0xff] %v1573
    %1582 = vst [vmem:[#allocation8 + $0x8] sm:$0xff] %v1578
    // Predicated region
    $region34: #{tpu_custom_call.1} parent=1 // pred_check
      _
    $region35: #{tpu_custom_call.1} parent=1 // pred_check_branch
      %1584 = sbr.rel (0) target = $region37
    $region36: #{tpu_custom_call.1} parent=1 // pred_region
      %s1586 = ssub.s32 256, 256
      %1587 = vsyncadd [#allocation4], %s1586
      %s1588 = sshll.u32 [#allocation8], 4
      %s1589 = int_to_ptr.vmem [resolvable:$true] %s1588
      %1594 = dma.vmem_to_hbm [thread:$0]  %s1589, 256, %s5, [#allocation4], 128, 128, 8
    $region37: #{tpu_custom_call.1} parent=1 // pred_fallthru
      _
    // Predicated region
    $region38: #{tpu_custom_call.1} parent=1 // pred_check
      _
    $region39: #{tpu_custom_call.1} parent=1 // pred_check_branch
      %1596 = sbr.rel (0) target = $region41
    $region40: #{tpu_custom_call.1} parent=1 // pred_region
      %1597 = dma.done [#allocation4], 256
    $region41: #{tpu_custom_call.1} parent=1 // pred_fallthru
      _
    %1598 = vsyncpa [#allocation3], 1
    %1599 = vsyncpa [#allocation6], 1
    %1600 = vsyncpa [#allocation4], 1

</llo_original>
